<compile_context>
chip_gen: v7x
topology: tpu7x:2x2x1
jax: 0.10.0
libtpu: 0.0.40
codegen_flags: <defaults>
</compile_context>

<pallas_src>
import functools

import jax
import jax.numpy as jnp
from jax import lax
from jax.experimental import pallas as pl
from jax.experimental.pallas import tpu as pltpu


def _round_up(n, m):
    return ((n + m - 1) // m) * m


def _cdiv(a, b):
    return -(-a // b)


# ----------------------------------------------------------------------------
# Shared fused MLP math: enc1 -> ReLU -> enc2 (=z) -> dec1 -> ReLU -> dec2.
# All intermediates stay in VMEM/vregs; MXU inputs use the weight dtype (bf16)
# with f32 accumulation via preferred_element_type.
# ----------------------------------------------------------------------------
def _mlp_forward(x_cdt, w1_ref, w2_ref, w3_ref, w4_ref, b_ref, hd, lp, d):
    cdt = x_cdt.dtype
    h = jnp.dot(x_cdt, w1_ref[...], preferred_element_type=jnp.float32)
    h = jnp.maximum(h + b_ref[0:1, 0:hd], 0.0)
    zf = jnp.dot(h.astype(cdt), w2_ref[...], preferred_element_type=jnp.float32)
    zf = zf + b_ref[1:2, 0:lp]
    g = jnp.dot(zf.astype(cdt), w3_ref[...], preferred_element_type=jnp.float32)
    g = jnp.maximum(g + b_ref[2:3, 0:hd], 0.0)
    y = jnp.dot(g.astype(cdt), w4_ref[...], preferred_element_type=jnp.float32)
    y = y + b_ref[3:4, 0:d]
    return y, zf


def _ae_fwd_kernel(x_ref, w1_ref, w2_ref, w3_ref, w4_ref, b_ref,
                   xhat_ref, z_ref, *, hd, lp, d):
    cdt = w1_ref.dtype  # bf16 compute dtype for the MXU
    # In-kernel cast (free VPU op under the MXU/DMA) instead of a wrapper pass.
    x_cdt = x_ref[...].astype(cdt)
    y, zf = _mlp_forward(x_cdt, w1_ref, w2_ref, w3_ref, w4_ref, b_ref, hd, lp, d)
    xhat_ref[...] = y.astype(xhat_ref.dtype)
    z_ref[...] = zf.astype(z_ref.dtype)


def _ae_loss_kernel(x_ref, w1_ref, w2_ref, w3_ref, w4_ref, b_ref,
                    sse_ref, *, hd, lp, d, tb, valid_b):
    cdt = w1_ref.dtype
    x_f32 = x_ref[...].astype(jnp.float32)
    y, _ = _mlp_forward(x_f32.astype(cdt), w1_ref, w2_ref, w3_ref, w4_ref,
                        b_ref, hd, lp, d)
    diff = y - x_f32
    # Mask padded batch rows (they hold zeros -> x_hat = propagated biases).
    rows = lax.broadcasted_iota(jnp.int32, (tb, 1), 0) + pl.program_id(0) * tb
    sq = jnp.where(rows < valid_b, diff * diff, 0.0)
    # Tiny per-tile partial SSE; x_hat / z never touch HBM on this path.
    sse_ref[...] = jnp.full((1, 8, 1), jnp.sum(sq), dtype=jnp.float32)


# ----------------------------------------------------------------------------
# Wrapper-side tiling / spec helpers
# ----------------------------------------------------------------------------
def _pick_tb(B, D, Lp):
    """Batch tile: big (amortize ~0.35us/step, fill MXU M), >=2 grid steps
    whenever the batch permits (both v7x TensorCores), bounded by a VMEM
    budget that is safe on every generation."""
    cap = 512
    if B <= 8:
        tb = 8
    else:
        n_steps = max(2 if B >= 32 else 1, _cdiv(B, cap))
        tb = _round_up(_cdiv(B, n_steps), 8)
    # Double-buffered per-tile IO (x, x_hat, z; worst case f32) under 24 MiB.
    def io_bytes(t):
        return 2 * t * (2 * D + Lp) * 4
    while tb > 8 and io_bytes(tb) > (24 << 20):
        tb = max(8, _round_up(tb // 2, 8))
    return tb


def _vmem_limit(TB, D, Hp, Lp, Bw):
    wbytes = (D * Hp + 2 * Hp * Lp + Hp * D) * 2 + 4 * Bw * 4   # weights + bias
    iobytes = 2 * TB * (2 * D + Lp) * 4                          # tiles, 2 bufs
    scratch = 6 * TB * max(D, Hp) * 4                            # in-kernel temps
    est = 2 * wbytes + iobytes + scratch
    # >= 32 MiB (v5e's default scoped limit is only 16 MiB), but stay well
    # under v7x's 64 MiB physical VMEM.
    return int(min(max(est, 32 << 20), 48 << 20))


def _const_spec(shape):
    """BlockSpec for grid-invariant operands (weights / packed bias).
    Single-buffered (their block never changes) to halve resident VMEM."""
    idx = lambda i: (0, 0)
    if hasattr(pl, "Buffered"):
        try:
            return pl.BlockSpec(shape, idx, pipeline_mode=pl.Buffered(1))
        except TypeError:  # pallas version without pipeline_mode kwarg
            pass
    return pl.BlockSpec(shape, idx)


def _input_specs(TB, D, Hp, Lp, Bw):
    return [
        pl.BlockSpec((TB, D), lambda i: (i, 0)),   # x batch tile (orig dtype)
        _const_spec((D, Hp)),                      # enc_w1 (resident)
        _const_spec((Hp, Lp)),                     # enc_w2 (resident)
        _const_spec((Lp, Hp)),                     # dec_w1 (resident)
        _const_spec((Hp, D)),                      # dec_w2 (resident)
        _const_spec((4, Bw)),                      # packed biases
    ]


def _weight_bytes(params):
    return sum(int(p.size) * p.dtype.itemsize
               for k, p in params.items() if k != "b") + int(params["b"].size) * 4


def _pad_batch(x_flat, BP):
    B = x_flat.shape[0]
    if BP == B:
        return x_flat
    # Zero pad only when the batch is not tile-aligned (deterministic rows).
    return jnp.pad(x_flat, ((0, BP - B), (0, 0)))


# ----------------------------------------------------------------------------
# Forward path: x -> (x_hat, z)
# ----------------------------------------------------------------------------
def _ae_forward_apply(params, x_flat, latent_dim):
    B, D = x_flat.shape
    Hp = params["w1"].shape[1]
    Lp = params["w2"].shape[1]
    Bw = params["b"].shape[1]

    TB = _pick_tb(B, D, Lp)
    BP = _round_up(B, TB)
    xp = _pad_batch(x_flat, BP)
    grid = (BP // TB,)

    kernel = functools.partial(_ae_fwd_kernel, hd=Hp, lp=Lp, d=D)
    flops = 2 * BP * (D * Hp + Hp * Lp + Lp * Hp + Hp * D)
    bytes_acc = (BP * D * xp.dtype.itemsize            # x in
                 + BP * D * x_flat.dtype.itemsize      # x_hat out
                 + BP * Lp * 4                         # z out
                 + _weight_bytes(params))

    x_hat, z = pl.pallas_call(
        kernel,
        out_shape=(
            jax.ShapeDtypeStruct((BP, D), x_flat.dtype),   # x_hat in input dtype
            jax.ShapeDtypeStruct((BP, Lp), jnp.float32),   # lane-dense padded z
        ),
        grid_spec=pltpu.PrefetchScalarGridSpec(
            num_scalar_prefetch=0,
            grid=grid,
            in_specs=_input_specs(TB, D, Hp, Lp, Bw),
            out_specs=[
                pl.BlockSpec((TB, D), lambda i: (i, 0)),
                pl.BlockSpec((TB, Lp), lambda i: (i, 0)),
            ],
        ),
        compiler_params=pltpu.CompilerParams(
            dimension_semantics=("parallel",),
            vmem_limit_bytes=_vmem_limit(TB, D, Hp, Lp, Bw)),
        cost_estimate=pl.CostEstimate(flops=flops, transcendentals=0,
                                      bytes_accessed=bytes_acc),
    )(xp, params["w1"], params["w2"], params["w3"], params["w4"], params["b"])

    return x_hat[:B], z[:B, :latent_dim]


# ----------------------------------------------------------------------------
# Loss path: x -> MSE(x, x_hat) without ever writing x_hat / z to HBM
# ----------------------------------------------------------------------------
def _ae_loss_apply(params, x_flat):
    B, D = x_flat.shape
    Hp = params["w1"].shape[1]
    Lp = params["w2"].shape[1]
    Bw = params["b"].shape[1]

    TB = _pick_tb(B, D, Lp)
    BP = _round_up(B, TB)
    xp = _pad_batch(x_flat, BP)
    n_steps = BP // TB

    kernel = functools.partial(_ae_loss_kernel, hd=Hp, lp=Lp, d=D,
                               tb=TB, valid_b=B)
    flops = 2 * BP * (D * Hp + Hp * Lp + Lp * Hp + Hp * D)
    bytes_acc = BP * D * xp.dtype.itemsize + n_steps * 8 * 4 + _weight_bytes(params)

    sse = pl.pallas_call(
        kernel,
        out_shape=jax.ShapeDtypeStruct((n_steps, 8, 1), jnp.float32),
        grid_spec=pltpu.PrefetchScalarGridSpec(
            num_scalar_prefetch=0,
            grid=(n_steps,),
            in_specs=_input_specs(TB, D, Hp, Lp, Bw),
            out_specs=pl.BlockSpec((1, 8, 1), lambda i: (i, 0, 0)),
        ),
        compiler_params=pltpu.CompilerParams(
            dimension_semantics=("parallel",),
            vmem_limit_bytes=_vmem_limit(TB, D, Hp, Lp, Bw)),
        cost_estimate=pl.CostEstimate(flops=flops, transcendentals=0,
                                      bytes_accessed=bytes_acc),
    )(xp, params["w1"], params["w2"], params["w3"], params["w4"], params["b"])

    return jnp.sum(sse[:, 0, 0]) / (B * D)


# ----------------------------------------------------------------------------
# Parameters: MLP encoder (Linear->ReLU->Linear), mirrored MLP decoder.
# Weights bf16 (f32 accumulate in kernel); hidden/latent lane-padded to 128;
# biases f32 packed into one (4, Bw) array (single tiny DMA).
# ----------------------------------------------------------------------------
def init_params(key, in_dim, hidden_dim, latent_dim, weight_dtype=jnp.bfloat16):
    ks = jax.random.split(key, 8)

    def lin(kw, kb, din, dout):
        scale = 1.0 / jnp.sqrt(jnp.asarray(din, jnp.float32))
        w = jax.random.uniform(kw, (din, dout), jnp.float32, -scale, scale)
        b = jax.random.uniform(kb, (dout,), jnp.float32, -scale, scale)
        return w, b

    w1, b1 = lin(ks[0], ks[1], in_dim, hidden_dim)       # enc layer 1
    w2, b2 = lin(ks[2], ks[3], hidden_dim, latent_dim)   # enc layer 2
    w3, b3 = lin(ks[4], ks[5], latent_dim, hidden_dim)   # dec layer 1
    w4, b4 = lin(ks[6], ks[7], hidden_dim, in_dim)       # dec layer 2

    hp = _round_up(hidden_dim, 128)
    lp = _round_up(latent_dim, 128)

    # Zero padding is mathematically inert: padded h/z/g columns stay 0 and
    # the corresponding weight rows are 0.
    w1p = jnp.zeros((in_dim, hp), jnp.float32).at[:, :hidden_dim].set(w1)
    w2p = jnp.zeros((hp, lp), jnp.float32).at[:hidden_dim, :latent_dim].set(w2)
    w3p = jnp.zeros((lp, hp), jnp.float32).at[:latent_dim, :hidden_dim].set(w3)
    w4p = jnp.zeros((hp, in_dim), jnp.float32).at[:hidden_dim, :].set(w4)

    bw = max(in_dim, hp, lp)
    bpack = jnp.zeros((4, bw), jnp.float32)
    bpack = bpack.at[0, :hidden_dim].set(b1)
    bpack = bpack.at[1, :latent_dim].set(b2)
    bpack = bpack.at[2, :hidden_dim].set(b3)
    bpack = bpack.at[3, :in_dim].set(b4)

    return dict(
        w1=w1p.astype(weight_dtype),
        w2=w2p.astype(weight_dtype),
        w3=w3p.astype(weight_dtype),
        w4=w4p.astype(weight_dtype),
        b=bpack,
    )


# ----------------------------------------------------------------------------
# AutoEncoder API (mirrors the PyTorch module)
# ----------------------------------------------------------------------------
def autoencoder_forward(params, x_nchw, latent_dim):
    """Mirrors AutoEncoder.forward: returns (x_hat, z)."""
    B, C, H, W = x_nchw.shape
    x_flat = x_nchw.reshape(B, C * H * W)
    x_hat_flat, z = _ae_forward_apply(params, x_flat, latent_dim)
    x_hat = x_hat_flat.reshape(B, C, H, W)
    return x_hat, z


def autoencoder_loss(params, x_nchw, latent_dim, beta=None):
    """Mirrors AutoEncoder.loss: MSE(x, x_hat). `beta` unused, as in reference.
    Uses the fused loss kernel (x_hat never round-trips through HBM)."""
    del beta, latent_dim
    B = x_nchw.shape[0]
    x_flat = x_nchw.reshape(B, -1)
    return _ae_loss_apply(params, x_flat)


if __name__ == "__main__":
    key = jax.random.PRNGKey(0)

    def run_case(k, B, C, H, W, hidden_dim, latent_dim):
        k_x, k_p = jax.random.split(k)
        in_dim = C * H * W
        x = jax.random.normal(k_x, (B, C, H, W), dtype=jnp.float32)
        params = init_params(k_p, in_dim, hidden_dim, latent_dim)

        fwd = jax.jit(autoencoder_forward, static_argnames=("latent_dim",))
        loss_fn = jax.jit(autoencoder_loss, static_argnames=("latent_dim",))

        x_hat, z = fwd(params, x, latent_dim=latent_dim)
        loss = loss_fn(params, x, latent_dim=latent_dim)
        jax.block_until_ready((x_hat, z, loss))

        assert x_hat.shape == (B, C, H, W), x_hat.shape
        assert z.shape == (B, latent_dim), z.shape

        # Plain-JAX reference (same bf16 weights, f32 math on f32 x).
        xf = x.reshape(B, in_dim)
        w1 = params["w1"].astype(jnp.float32)[:, :hidden_dim]
        w2 = params["w2"].astype(jnp.float32)[:hidden_dim, :latent_dim]
        w3 = params["w3"].astype(jnp.float32)[:latent_dim, :hidden_dim]
        w4 = params["w4"].astype(jnp.float32)[:hidden_dim, :]
        b1 = params["b"][0, :hidden_dim]
        b2 = params["b"][1, :latent_dim]
        b3 = params["b"][2, :hidden_dim]
        b4 = params["b"][3, :in_dim]
        h = jnp.maximum(xf @ w1 + b1, 0.0)
        z_ref = h @ w2 + b2
        g = jnp.maximum(z_ref @ w3 + b3, 0.0)
        x_hat_ref = (g @ w4 + b4).reshape(B, C, H, W)
        loss_ref = jnp.mean((x - x_hat_ref) ** 2)

        # Tolerances absorb bf16 input/intermediate rounding (f32 accumulate).
        assert jnp.allclose(x_hat, x_hat_ref, atol=5e-2, rtol=5e-2)
        assert jnp.allclose(z, z_ref, atol=5e-2, rtol=5e-2)
        assert jnp.isfinite(loss)
        assert jnp.allclose(loss, loss_ref, atol=2e-2, rtol=2e-2), (loss, loss_ref)

    k1, k2 = jax.random.split(key)
    # Case 1: lane-aligned dims, single grid step (small batch).
    run_case(k1, B=2, C=4, H=16, W=16, hidden_dim=128, latent_dim=32)
    # Case 2: multi-step parallel grid, padded batch rows in the loss,
    # non-multiple-of-128 in_dim / hidden / latent (exercises padding paths).
    run_case(k2, B=70, C=3, H=10, W=10, hidden_dim=48, latent_dim=20)

    print("KERNEL_OK")
</pallas_src>

<mosaic_0001>
module attributes {stable_mosaic.version = 11 : i64} {
  func.func @_ae_fwd_kernel(%arg0: i32, %arg1: memref<8x1024xf32, #tpu.memory_space<vmem>>, %arg2: memref<1024x128xbf16, #tpu.memory_space<vmem>>, %arg3: memref<128x128xbf16, #tpu.memory_space<vmem>>, %arg4: memref<128x128xbf16, #tpu.memory_space<vmem>>, %arg5: memref<128x1024xbf16, #tpu.memory_space<vmem>>, %arg6: memref<4x1024xf32, #tpu.memory_space<vmem>>, %arg7: memref<8x1024xf32, #tpu.memory_space<vmem>>, %arg8: memref<8x128xf32, #tpu.memory_space<vmem>>) attributes {dimension_semantics = [#tpu.dimension_semantics<parallel>], iteration_bounds = array<i64: 1>, scalar_prefetch = 0 : i64, scratch_operands = 0 : i64, tpu.core_type = #tpu.core_type<tc>, window_params = [{transform_indices = @transform_0, window_bounds = array<i64: 8, 1024>}, {pipeline_mode = #tpu.pipeline_mode<synchronous>, transform_indices = @transform_1, window_bounds = array<i64: 1024, 128>}, {pipeline_mode = #tpu.pipeline_mode<synchronous>, transform_indices = @transform_2, window_bounds = array<i64: 128, 128>}, {pipeline_mode = #tpu.pipeline_mode<synchronous>, transform_indices = @transform_3, window_bounds = array<i64: 128, 128>}, {pipeline_mode = #tpu.pipeline_mode<synchronous>, transform_indices = @transform_4, window_bounds = array<i64: 128, 1024>}, {pipeline_mode = #tpu.pipeline_mode<synchronous>, transform_indices = @transform_5, window_bounds = array<i64: 4, 1024>}, {transform_indices = @transform_6, window_bounds = array<i64: 8, 1024>}, {transform_indices = @transform_7, window_bounds = array<i64: 8, 128>}]} {
    %c0 = arith.constant 0 : index
    %c0_0 = arith.constant 0 : index
    %0 = vector.load %arg1[%c0, %c0_0] : memref<8x1024xf32, #tpu.memory_space<vmem>>, vector<8x1024xf32>
    %1 = arith.truncf %0 : vector<8x1024xf32> to vector<8x1024xbf16>
    %c0_1 = arith.constant 0 : index
    %c0_2 = arith.constant 0 : index
    %2 = vector.load %arg2[%c0_1, %c0_2] : memref<1024x128xbf16, #tpu.memory_space<vmem>>, vector<1024x128xbf16>
    %cst = arith.constant dense<0.000000e+00> : vector<8x128xf32>
    %3 = tpu.matmul %1, %2, %cst {dimension_numbers = #tpu.dot_dimension_numbers<[1], [0], [0], [1], [0, 0, 1, 1], [], []>} : vector<8x1024xbf16>, vector<1024x128xbf16>, vector<8x128xf32> -> vector<8x128xf32>
    %c0_3 = arith.constant 0 : index
    %c0_4 = arith.constant 0 : index
    %4 = vector.load %arg6[%c0_3, %c0_4] : memref<4x1024xf32, #tpu.memory_space<vmem>>, vector<1x128xf32>
    %5 = vector.broadcast %4 : vector<1x128xf32> to vector<8x128xf32>
    %6 = arith.addf %3, %5 : vector<8x128xf32>
    %cst_5 = arith.constant 0.000000e+00 : f32
    %7 = vector.broadcast %cst_5 : f32 to vector<8x128xf32>
    %8 = arith.maximumf %6, %7 : vector<8x128xf32>
    %9 = arith.truncf %8 : vector<8x128xf32> to vector<8x128xbf16>
    %c0_6 = arith.constant 0 : index
    %c0_7 = arith.constant 0 : index
    %10 = vector.load %arg3[%c0_6, %c0_7] : memref<128x128xbf16, #tpu.memory_space<vmem>>, vector<128x128xbf16>
    %cst_8 = arith.constant dense<0.000000e+00> : vector<8x128xf32>
    %11 = tpu.matmul %9, %10, %cst_8 {dimension_numbers = #tpu.dot_dimension_numbers<[1], [0], [0], [1], [0, 0, 1, 1], [], []>} : vector<8x128xbf16>, vector<128x128xbf16>, vector<8x128xf32> -> vector<8x128xf32>
    %c1 = arith.constant 1 : index
    %c0_9 = arith.constant 0 : index
    %12 = vector.load %arg6[%c1, %c0_9] : memref<4x1024xf32, #tpu.memory_space<vmem>>, vector<1x128xf32>
    %13 = vector.broadcast %12 : vector<1x128xf32> to vector<8x128xf32>
    %14 = arith.addf %11, %13 : vector<8x128xf32>
    %15 = arith.truncf %14 : vector<8x128xf32> to vector<8x128xbf16>
    %c0_10 = arith.constant 0 : index
    %c0_11 = arith.constant 0 : index
    %16 = vector.load %arg4[%c0_10, %c0_11] : memref<128x128xbf16, #tpu.memory_space<vmem>>, vector<128x128xbf16>
    %cst_12 = arith.constant dense<0.000000e+00> : vector<8x128xf32>
    %17 = tpu.matmul %15, %16, %cst_12 {dimension_numbers = #tpu.dot_dimension_numbers<[1], [0], [0], [1], [0, 0, 1, 1], [], []>} : vector<8x128xbf16>, vector<128x128xbf16>, vector<8x128xf32> -> vector<8x128xf32>
    %c2 = arith.constant 2 : index
    %c0_13 = arith.constant 0 : index
    %18 = vector.load %arg6[%c2, %c0_13] : memref<4x1024xf32, #tpu.memory_space<vmem>>, vector<1x128xf32>
    %19 = vector.broadcast %18 : vector<1x128xf32> to vector<8x128xf32>
    %20 = arith.addf %17, %19 : vector<8x128xf32>
    %cst_14 = arith.constant 0.000000e+00 : f32
    %21 = vector.broadcast %cst_14 : f32 to vector<8x128xf32>
    %22 = arith.maximumf %20, %21 : vector<8x128xf32>
    %23 = arith.truncf %22 : vector<8x128xf32> to vector<8x128xbf16>
    %c0_15 = arith.constant 0 : index
    %c0_16 = arith.constant 0 : index
    %24 = vector.load %arg5[%c0_15, %c0_16] : memref<128x1024xbf16, #tpu.memory_space<vmem>>, vector<128x1024xbf16>
    %cst_17 = arith.constant dense<0.000000e+00> : vector<8x1024xf32>
    %25 = tpu.matmul %23, %24, %cst_17 {dimension_numbers = #tpu.dot_dimension_numbers<[1], [0], [0], [1], [0, 0, 1, 1], [], []>} : vector<8x128xbf16>, vector<128x1024xbf16>, vector<8x1024xf32> -> vector<8x1024xf32>
    %c3 = arith.constant 3 : index
    %c0_18 = arith.constant 0 : index
    %26 = vector.load %arg6[%c3, %c0_18] : memref<4x1024xf32, #tpu.memory_space<vmem>>, vector<1x1024xf32>
    %27 = vector.broadcast %26 : vector<1x1024xf32> to vector<8x1024xf32>
    %28 = arith.addf %25, %27 : vector<8x1024xf32>
    %c0_19 = arith.constant 0 : index
    %c0_20 = arith.constant 0 : index
    %29 = vector.load %arg7[%c0_19, %c0_20] : memref<8x1024xf32, #tpu.memory_space<vmem>>, vector<8x1024xf32>
    tpu.vector_store %arg7[%c0_19, %c0_20], %28 {strides = array<i32>} : memref<8x1024xf32, #tpu.memory_space<vmem>>, vector<8x1024xf32>,
    %c0_21 = arith.constant 0 : index
    %c0_22 = arith.constant 0 : index
    %30 = vector.load %arg8[%c0_21, %c0_22] : memref<8x128xf32, #tpu.memory_space<vmem>>, vector<8x128xf32>
    tpu.vector_store %arg8[%c0_21, %c0_22], %14 {strides = array<i32>} : memref<8x128xf32, #tpu.memory_space<vmem>>, vector<8x128xf32>,
    return
  }
  func.func @transform_0(%arg0: i32) -> (i32, i32) {
    %c0_i32 = arith.constant 0 : i32
    %c0_i32_0 = arith.constant 0 : i32
    return %arg0, %c0_i32 : i32, i32
  }
  func.func @transform_1(%arg0: i32) -> (i32, i32) {
    %c0_i32 = arith.constant 0 : i32
    %c0_i32_0 = arith.constant 0 : i32
    %c0_i32_1 = arith.constant 0 : i32
    return %c0_i32, %c0_i32_0 : i32, i32
  }
  func.func @transform_2(%arg0: i32) -> (i32, i32) {
    %c0_i32 = arith.constant 0 : i32
    %c0_i32_0 = arith.constant 0 : i32
    %c0_i32_1 = arith.constant 0 : i32
    return %c0_i32, %c0_i32_0 : i32, i32
  }
  func.func @transform_3(%arg0: i32) -> (i32, i32) {
    %c0_i32 = arith.constant 0 : i32
    %c0_i32_0 = arith.constant 0 : i32
    %c0_i32_1 = arith.constant 0 : i32
    return %c0_i32, %c0_i32_0 : i32, i32
  }
  func.func @transform_4(%arg0: i32) -> (i32, i32) {
    %c0_i32 = arith.constant 0 : i32
    %c0_i32_0 = arith.constant 0 : i32
    %c0_i32_1 = arith.constant 0 : i32
    return %c0_i32, %c0_i32_0 : i32, i32
  }
  func.func @transform_5(%arg0: i32) -> (i32, i32) {
    %c0_i32 = arith.constant 0 : i32
    %c0_i32_0 = arith.constant 0 : i32
    %c0_i32_1 = arith.constant 0 : i32
    return %c0_i32, %c0_i32_0 : i32, i32
  }
  func.func @transform_6(%arg0: i32) -> (i32, i32) {
    %c0_i32 = arith.constant 0 : i32
    %c0_i32_0 = arith.constant 0 : i32
    return %arg0, %c0_i32 : i32, i32
  }
  func.func @transform_7(%arg0: i32) -> (i32, i32) {
    %c0_i32 = arith.constant 0 : i32
    %c0_i32_0 = arith.constant 0 : i32
    return %arg0, %c0_i32 : i32, i32
  }
}

</mosaic_0001>

<llo_original>
// kernel: autoencoder_forward.1
$region0: #{autoencoder_forward.1}
  #allocation0 [shape = 'u32[]', space=smem, size = 0x4, offset = 0x4, fixed_abs, tag = 'smem constant byte address 0x4 - core index']
  #allocation1 [shape = 'u32[144,128]{1,0:T(1,128)}', space=vmem, size = 0x12000, scoped, tag = 'internal scratch']
  %s0 = inlined_call_operand.vmem [shape: f32[8,1024], index: 0, kind: input, shape index: {}]
  %s1 = inlined_call_operand.hbm [shape: bf16[1024,128], index: 1, kind: input, shape index: {}]
  %s2 = inlined_call_operand.vmem [shape: bf16[128,128], index: 2, kind: input, shape index: {}]
  %s3 = inlined_call_operand.vmem [shape: bf16[128,128], index: 3, kind: input, shape index: {}]
  %s4 = inlined_call_operand.hbm [shape: bf16[128,1024], index: 4, kind: input, shape index: {}]
  %s5 = inlined_call_operand.vmem [shape: f32[4,1024], index: 5, kind: input, shape index: {}]
  %s6 = inlined_call_operand.vmem [shape: f32[8,1024], index: 6, kind: output, shape index: {0}]
  %s7 = inlined_call_operand.vmem [shape: f32[8,128], index: 7, kind: output, shape index: {1}]
  %8 = xla_tuple %s6, %s7
  %s9 = sld [smem:[#allocation0]]
  $region50: #{autoencoder_forward.1} parent=0
    _
  %s11 = ssub.s32 1, %s9
  %s12 = scalar_select 0, %s11, %s9
  $region1: #{autoencoder_forward.1} parent=0
    #allocation2 [shape = 'u8[262144]{0}', space=vmem, size = 0x40000, scoped, tag = 'input window, operand 1, single buffered']
    #allocation3 [shape = 's32[1]{0}', space=sflag, size = 0x4, scoped, tag = 'scoped memory for autoencoder_forward.1']
    #allocation4 [shape = 'u8[262144]{0}', space=vmem, size = 0x40000, scoped, tag = 'input window, operand 4, single buffered']
    #allocation5 [shape = 's32[1]{0}', space=sflag, size = 0x4, scoped, tag = 'scoped memory for autoencoder_forward.1']
    %13 = vsyncpa [#allocation3], 0
    %14 = vsyncpa [#allocation5], 0
    // Predicated region
    $region2: #{autoencoder_forward.1} parent=1 // pred_check
      _
    $region3: #{autoencoder_forward.1} parent=1 // pred_check_branch
      %16 = sbr.rel (0) target = $region5
    $region4: #{autoencoder_forward.1} parent=1 // pred_region
      _
    $region5: #{autoencoder_forward.1} parent=1 // pred_fallthru
      _
    // Predicated region
    $region6: #{autoencoder_forward.1} parent=1 // pred_check
      _
    $region7: #{autoencoder_forward.1} parent=1 // pred_check_branch
      %18 = sbr.rel (0) target = $region9
    $region8: #{autoencoder_forward.1} parent=1 // pred_region
      %s20 = ssub.s32 8192, 8192
      %21 = vsyncadd [#allocation3], %s20
      %s22 = sshll.u32 [#allocation2], 4
      %s23 = int_to_ptr.vmem [resolvable:$true] %s22
      %28 = dma.hbm_to_vmem [thread:$0]  %s1, 8192, %s23, [#allocation3], 64, 64, 4
    $region9: #{autoencoder_forward.1} parent=1 // pred_fallthru
      _
    // Predicated region
    $region10: #{autoencoder_forward.1} parent=1 // pred_check
      _
    $region11: #{autoencoder_forward.1} parent=1 // pred_check_branch
      %30 = sbr.rel (0) target = $region13
    $region12: #{autoencoder_forward.1} parent=1 // pred_region
      _
    $region13: #{autoencoder_forward.1} parent=1 // pred_fallthru
      _
    // Predicated region
    $region14: #{autoencoder_forward.1} parent=1 // pred_check
      _
    $region15: #{autoencoder_forward.1} parent=1 // pred_check_branch
      %32 = sbr.rel (0) target = $region17
    $region16: #{autoencoder_forward.1} parent=1 // pred_region
      _
    $region17: #{autoencoder_forward.1} parent=1 // pred_fallthru
      _
    // Predicated region
    $region18: #{autoencoder_forward.1} parent=1 // pred_check
      _
    $region19: #{autoencoder_forward.1} parent=1 // pred_check_branch
      %34 = sbr.rel (0) target = $region21
    $region20: #{autoencoder_forward.1} parent=1 // pred_region
      %s36 = ssub.s32 8192, 8192
      %37 = vsyncadd [#allocation5], %s36
      %s38 = sshll.u32 [#allocation4], 4
      %s39 = int_to_ptr.vmem [resolvable:$true] %s38
      %44 = dma.hbm_to_vmem [thread:$0]  %s4, 8192, %s39, [#allocation5], 512, 512, 32
    $region21: #{autoencoder_forward.1} parent=1 // pred_fallthru
      _
    // Predicated region
    $region22: #{autoencoder_forward.1} parent=1 // pred_check
      _
    $region23: #{autoencoder_forward.1} parent=1 // pred_check_branch
      %46 = sbr.rel (0) target = $region25
    $region24: #{autoencoder_forward.1} parent=1 // pred_region
      _
    $region25: #{autoencoder_forward.1} parent=1 // pred_fallthru
      _
    // Predicated region
    $region26: #{autoencoder_forward.1} parent=1 // pred_check
      _
    $region27: #{autoencoder_forward.1} parent=1 // pred_check_branch
      %48 = sbr.rel (0) target = $region29
    $region28: #{autoencoder_forward.1} parent=1 // pred_region
      %49 = dma.done [#allocation3], 8192
    $region29: #{autoencoder_forward.1} parent=1 // pred_fallthru
      _
    // Predicated region
    $region30: #{autoencoder_forward.1} parent=1 // pred_check
      _
    $region31: #{autoencoder_forward.1} parent=1 // pred_check_branch
      %51 = sbr.rel (0) target = $region33
    $region32: #{autoencoder_forward.1} parent=1 // pred_region
      %52 = dma.done [#allocation5], 8192
    $region33: #{autoencoder_forward.1} parent=1 // pred_fallthru
      _
    %v54 = vld [vmem:[%s0] sm:$0xff]
    %v55 = vld [vmem:[%s0 + $0x8] sm:$0xff]
    %v56 = vld [vmem:[%s0 + $0x10] sm:$0xff]
    %v57 = vld [vmem:[%s0 + $0x18] sm:$0xff]
    %v58 = vld [vmem:[%s0 + $0x20] sm:$0xff]
    %v59 = vld [vmem:[%s0 + $0x28] sm:$0xff]
    %v60 = vld [vmem:[%s0 + $0x30] sm:$0xff]
    %v61 = vld [vmem:[%s0 + $0x38] sm:$0xff]
    %v62 = vpack.c.bf16 %v54, %v54
    %v63 = vpack.c.bf16 %v55, %v55
    %v64 = vpack.c.bf16 %v56, %v56
    %v65 = vpack.c.bf16 %v57, %v57
    %v66 = vpack.c.bf16 %v58, %v58
    %v67 = vpack.c.bf16 %v59, %v59
    %v68 = vpack.c.bf16 %v60, %v60
    %v69 = vpack.c.bf16 %v61, %v61
    %v70 = vld [vmem:[#allocation2] sm:$0xf]
    %v71 = vld [vmem:[#allocation2 + $0x4] sm:$0xf]
    %v72 = vld [vmem:[#allocation2 + $0x8] sm:$0xf]
    %v73 = vld [vmem:[#allocation2 + $0xc] sm:$0xf]
    %v74 = vld [vmem:[#allocation2 + $0x10] sm:$0xf]
    %v75 = vld [vmem:[#allocation2 + $0x14] sm:$0xf]
    %v76 = vld [vmem:[#allocation2 + $0x18] sm:$0xf]
    %v77 = vld [vmem:[#allocation2 + $0x1c] sm:$0xf]
    %v78 = vld [vmem:[#allocation2 + $0x20] sm:$0xf]
    %v79 = vld [vmem:[#allocation2 + $0x24] sm:$0xf]
    %v80 = vld [vmem:[#allocation2 + $0x28] sm:$0xf]
    %v81 = vld [vmem:[#allocation2 + $0x2c] sm:$0xf]
    %v82 = vld [vmem:[#allocation2 + $0x30] sm:$0xf]
    %v83 = vld [vmem:[#allocation2 + $0x34] sm:$0xf]
    %v84 = vld [vmem:[#allocation2 + $0x38] sm:$0xf]
    %v85 = vld [vmem:[#allocation2 + $0x3c] sm:$0xf]
    %v86 = vld [vmem:[#allocation2 + $0x40] sm:$0xf]
    %v87 = vld [vmem:[#allocation2 + $0x44] sm:$0xf]
    %v88 = vld [vmem:[#allocation2 + $0x48] sm:$0xf]
    %v89 = vld [vmem:[#allocation2 + $0x4c] sm:$0xf]
    %v90 = vld [vmem:[#allocation2 + $0x50] sm:$0xf]
    %v91 = vld [vmem:[#allocation2 + $0x54] sm:$0xf]
    %v92 = vld [vmem:[#allocation2 + $0x58] sm:$0xf]
    %v93 = vld [vmem:[#allocation2 + $0x5c] sm:$0xf]
    %v94 = vld [vmem:[#allocation2 + $0x60] sm:$0xf]
    %v95 = vld [vmem:[#allocation2 + $0x64] sm:$0xf]
    %v96 = vld [vmem:[#allocation2 + $0x68] sm:$0xf]
    %v97 = vld [vmem:[#allocation2 + $0x6c] sm:$0xf]
    %v98 = vld [vmem:[#allocation2 + $0x70] sm:$0xf]
    %v99 = vld [vmem:[#allocation2 + $0x74] sm:$0xf]
    %v100 = vld [vmem:[#allocation2 + $0x78] sm:$0xf]
    %v101 = vld [vmem:[#allocation2 + $0x7c] sm:$0xf]
    %v102 = vld [vmem:[#allocation2 + $0x80] sm:$0xf]
    %v103 = vld [vmem:[#allocation2 + $0x84] sm:$0xf]
    %v104 = vld [vmem:[#allocation2 + $0x88] sm:$0xf]
    %v105 = vld [vmem:[#allocation2 + $0x8c] sm:$0xf]
    %v106 = vld [vmem:[#allocation2 + $0x90] sm:$0xf]
    %v107 = vld [vmem:[#allocation2 + $0x94] sm:$0xf]
    %v108 = vld [vmem:[#allocation2 + $0x98] sm:$0xf]
    %v109 = vld [vmem:[#allocation2 + $0x9c] sm:$0xf]
    %v110 = vld [vmem:[#allocation2 + $0xa0] sm:$0xf]
    %v111 = vld [vmem:[#allocation2 + $0xa4] sm:$0xf]
    %v112 = vld [vmem:[#allocation2 + $0xa8] sm:$0xf]
    %v113 = vld [vmem:[#allocation2 + $0xac] sm:$0xf]
    %v114 = vld [vmem:[#allocation2 + $0xb0] sm:$0xf]
    %v115 = vld [vmem:[#allocation2 + $0xb4] sm:$0xf]
    %v116 = vld [vmem:[#allocation2 + $0xb8] sm:$0xf]
    %v117 = vld [vmem:[#allocation2 + $0xbc] sm:$0xf]
    %v118 = vld [vmem:[#allocation2 + $0xc0] sm:$0xf]
    %v119 = vld [vmem:[#allocation2 + $0xc4] sm:$0xf]
    %v120 = vld [vmem:[#allocation2 + $0xc8] sm:$0xf]
    %v121 = vld [vmem:[#allocation2 + $0xcc] sm:$0xf]
    %v122 = vld [vmem:[#allocation2 + $0xd0] sm:$0xf]
    %v123 = vld [vmem:[#allocation2 + $0xd4] sm:$0xf]
    %v124 = vld [vmem:[#allocation2 + $0xd8] sm:$0xf]
    %v125 = vld [vmem:[#allocation2 + $0xdc] sm:$0xf]
    %v126 = vld [vmem:[#allocation2 + $0xe0] sm:$0xf]
    %v127 = vld [vmem:[#allocation2 + $0xe4] sm:$0xf]
    %v128 = vld [vmem:[#allocation2 + $0xe8] sm:$0xf]
    %v129 = vld [vmem:[#allocation2 + $0xec] sm:$0xf]
    %v130 = vld [vmem:[#allocation2 + $0xf0] sm:$0xf]
    %v131 = vld [vmem:[#allocation2 + $0xf4] sm:$0xf]
    %v132 = vld [vmem:[#allocation2 + $0xf8] sm:$0xf]
    %v133 = vld [vmem:[#allocation2 + $0xfc] sm:$0xf]
    %v134 = vld [vmem:[#allocation2 + $0x100] sm:$0xf]
    %v135 = vld [vmem:[#allocation2 + $0x104] sm:$0xf]
    %v136 = vld [vmem:[#allocation2 + $0x108] sm:$0xf]
    %v137 = vld [vmem:[#allocation2 + $0x10c] sm:$0xf]
    %v138 = vld [vmem:[#allocation2 + $0x110] sm:$0xf]
    %v139 = vld [vmem:[#allocation2 + $0x114] sm:$0xf]
    %v140 = vld [vmem:[#allocation2 + $0x118] sm:$0xf]
    %v141 = vld [vmem:[#allocation2 + $0x11c] sm:$0xf]
    %v142 = vld [vmem:[#allocation2 + $0x120] sm:$0xf]
    %v143 = vld [vmem:[#allocation2 + $0x124] sm:$0xf]
    %v144 = vld [vmem:[#allocation2 + $0x128] sm:$0xf]
    %v145 = vld [vmem:[#allocation2 + $0x12c] sm:$0xf]
    %v146 = vld [vmem:[#allocation2 + $0x130] sm:$0xf]
    %v147 = vld [vmem:[#allocation2 + $0x134] sm:$0xf]
    %v148 = vld [vmem:[#allocation2 + $0x138] sm:$0xf]
    %v149 = vld [vmem:[#allocation2 + $0x13c] sm:$0xf]
    %v150 = vld [vmem:[#allocation2 + $0x140] sm:$0xf]
    %v151 = vld [vmem:[#allocation2 + $0x144] sm:$0xf]
    %v152 = vld [vmem:[#allocation2 + $0x148] sm:$0xf]
    %v153 = vld [vmem:[#allocation2 + $0x14c] sm:$0xf]
    %v154 = vld [vmem:[#allocation2 + $0x150] sm:$0xf]
    %v155 = vld [vmem:[#allocation2 + $0x154] sm:$0xf]
    %v156 = vld [vmem:[#allocation2 + $0x158] sm:$0xf]
    %v157 = vld [vmem:[#allocation2 + $0x15c] sm:$0xf]
    %v158 = vld [vmem:[#allocation2 + $0x160] sm:$0xf]
    %v159 = vld [vmem:[#allocation2 + $0x164] sm:$0xf]
    %v160 = vld [vmem:[#allocation2 + $0x168] sm:$0xf]
    %v161 = vld [vmem:[#allocation2 + $0x16c] sm:$0xf]
    %v162 = vld [vmem:[#allocation2 + $0x170] sm:$0xf]
    %v163 = vld [vmem:[#allocation2 + $0x174] sm:$0xf]
    %v164 = vld [vmem:[#allocation2 + $0x178] sm:$0xf]
    %v165 = vld [vmem:[#allocation2 + $0x17c] sm:$0xf]
    %v166 = vld [vmem:[#allocation2 + $0x180] sm:$0xf]
    %v167 = vld [vmem:[#allocation2 + $0x184] sm:$0xf]
    %v168 = vld [vmem:[#allocation2 + $0x188] sm:$0xf]
    %v169 = vld [vmem:[#allocation2 + $0x18c] sm:$0xf]
    %v170 = vld [vmem:[#allocation2 + $0x190] sm:$0xf]
    %v171 = vld [vmem:[#allocation2 + $0x194] sm:$0xf]
    %v172 = vld [vmem:[#allocation2 + $0x198] sm:$0xf]
    %v173 = vld [vmem:[#allocation2 + $0x19c] sm:$0xf]
    %v174 = vld [vmem:[#allocation2 + $0x1a0] sm:$0xf]
    %v175 = vld [vmem:[#allocation2 + $0x1a4] sm:$0xf]
    %v176 = vld [vmem:[#allocation2 + $0x1a8] sm:$0xf]
    %v177 = vld [vmem:[#allocation2 + $0x1ac] sm:$0xf]
    %v178 = vld [vmem:[#allocation2 + $0x1b0] sm:$0xf]
    %v179 = vld [vmem:[#allocation2 + $0x1b4] sm:$0xf]
    %v180 = vld [vmem:[#allocation2 + $0x1b8] sm:$0xf]
    %v181 = vld [vmem:[#allocation2 + $0x1bc] sm:$0xf]
    %v182 = vld [vmem:[#allocation2 + $0x1c0] sm:$0xf]
    %v183 = vld [vmem:[#allocation2 + $0x1c4] sm:$0xf]
    %v184 = vld [vmem:[#allocation2 + $0x1c8] sm:$0xf]
    %v185 = vld [vmem:[#allocation2 + $0x1cc] sm:$0xf]
    %v186 = vld [vmem:[#allocation2 + $0x1d0] sm:$0xf]
    %v187 = vld [vmem:[#allocation2 + $0x1d4] sm:$0xf]
    %v188 = vld [vmem:[#allocation2 + $0x1d8] sm:$0xf]
    %v189 = vld [vmem:[#allocation2 + $0x1dc] sm:$0xf]
    %v190 = vld [vmem:[#allocation2 + $0x1e0] sm:$0xf]
    %v191 = vld [vmem:[#allocation2 + $0x1e4] sm:$0xf]
    %v192 = vld [vmem:[#allocation2 + $0x1e8] sm:$0xf]
    %v193 = vld [vmem:[#allocation2 + $0x1ec] sm:$0xf]
    %v194 = vld [vmem:[#allocation2 + $0x1f0] sm:$0xf]
    %v195 = vld [vmem:[#allocation2 + $0x1f4] sm:$0xf]
    %v196 = vld [vmem:[#allocation2 + $0x1f8] sm:$0xf]
    %v197 = vld [vmem:[#allocation2 + $0x1fc] sm:$0xf]
    %v198 = vld [vmem:[%s5] sm:$0x1]
    %v199 = vlaneseq
    %v200 = vshrl.u32 %v199, 7
    %v201 = vsub.s32 0, %v200
    %v202 = vrot.slane %v198, %v201
    %v331 = vunpack.c.l.b16 %v70
    %v332 = vunpack.c.l.b16 %v71
    %v333 = vunpack.c.l.b16 %v72
    %v334 = vunpack.c.l.b16 %v73
    %v335 = vunpack.c.l.b16 %v74
    %v336 = vunpack.c.l.b16 %v75
    %v337 = vunpack.c.l.b16 %v76
    %v338 = vunpack.c.l.b16 %v77
    %v339 = vunpack.c.l.b16 %v78
    %v340 = vunpack.c.l.b16 %v79
    %v341 = vunpack.c.l.b16 %v80
    %v342 = vunpack.c.l.b16 %v81
    %v343 = vunpack.c.l.b16 %v82
    %v344 = vunpack.c.l.b16 %v83
    %v345 = vunpack.c.l.b16 %v84
    %v346 = vunpack.c.l.b16 %v85
    %v347 = vunpack.c.l.b16 %v86
    %v348 = vunpack.c.l.b16 %v87
    %v349 = vunpack.c.l.b16 %v88
    %v350 = vunpack.c.l.b16 %v89
    %v351 = vunpack.c.l.b16 %v90
    %v352 = vunpack.c.l.b16 %v91
    %v353 = vunpack.c.l.b16 %v92
    %v354 = vunpack.c.l.b16 %v93
    %v355 = vunpack.c.l.b16 %v94
    %v356 = vunpack.c.l.b16 %v95
    %v357 = vunpack.c.l.b16 %v96
    %v358 = vunpack.c.l.b16 %v97
    %v359 = vunpack.c.l.b16 %v98
    %v360 = vunpack.c.l.b16 %v99
    %v361 = vunpack.c.l.b16 %v100
    %v362 = vunpack.c.l.b16 %v101
    %v363 = vunpack.c.l.b16 %v102
    %v364 = vunpack.c.l.b16 %v103
    %v365 = vunpack.c.l.b16 %v104
    %v366 = vunpack.c.l.b16 %v105
    %v367 = vunpack.c.l.b16 %v106
    %v368 = vunpack.c.l.b16 %v107
    %v369 = vunpack.c.l.b16 %v108
    %v370 = vunpack.c.l.b16 %v109
    %v371 = vunpack.c.l.b16 %v110
    %v372 = vunpack.c.l.b16 %v111
    %v373 = vunpack.c.l.b16 %v112
    %v374 = vunpack.c.l.b16 %v113
    %v375 = vunpack.c.l.b16 %v114
    %v376 = vunpack.c.l.b16 %v115
    %v377 = vunpack.c.l.b16 %v116
    %v378 = vunpack.c.l.b16 %v117
    %v379 = vunpack.c.l.b16 %v118
    %v380 = vunpack.c.l.b16 %v119
    %v381 = vunpack.c.l.b16 %v120
    %v382 = vunpack.c.l.b16 %v121
    %v383 = vunpack.c.l.b16 %v122
    %v384 = vunpack.c.l.b16 %v123
    %v385 = vunpack.c.l.b16 %v124
    %v386 = vunpack.c.l.b16 %v125
    %v387 = vunpack.c.l.b16 %v126
    %v388 = vunpack.c.l.b16 %v127
    %v389 = vunpack.c.l.b16 %v128
    %v390 = vunpack.c.l.b16 %v129
    %v391 = vunpack.c.l.b16 %v130
    %v392 = vunpack.c.l.b16 %v131
    %v393 = vunpack.c.l.b16 %v132
    %v394 = vunpack.c.l.b16 %v133
    %v395 = vunpack.c.l.b16 %v134
    %v396 = vunpack.c.l.b16 %v135
    %v397 = vunpack.c.l.b16 %v136
    %v398 = vunpack.c.l.b16 %v137
    %v399 = vunpack.c.l.b16 %v138
    %v400 = vunpack.c.l.b16 %v139
    %v401 = vunpack.c.l.b16 %v140
    %v402 = vunpack.c.l.b16 %v141
    %v403 = vunpack.c.l.b16 %v142
    %v404 = vunpack.c.l.b16 %v143
    %v405 = vunpack.c.l.b16 %v144
    %v406 = vunpack.c.l.b16 %v145
    %v407 = vunpack.c.l.b16 %v146
    %v408 = vunpack.c.l.b16 %v147
    %v409 = vunpack.c.l.b16 %v148
    %v410 = vunpack.c.l.b16 %v149
    %v411 = vunpack.c.l.b16 %v150
    %v412 = vunpack.c.l.b16 %v151
    %v413 = vunpack.c.l.b16 %v152
    %v414 = vunpack.c.l.b16 %v153
    %v415 = vunpack.c.l.b16 %v154
    %v416 = vunpack.c.l.b16 %v155
    %v417 = vunpack.c.l.b16 %v156
    %v418 = vunpack.c.l.b16 %v157
    %v419 = vunpack.c.l.b16 %v158
    %v420 = vunpack.c.l.b16 %v159
    %v421 = vunpack.c.l.b16 %v160
    %v422 = vunpack.c.l.b16 %v161
    %v423 = vunpack.c.l.b16 %v162
    %v424 = vunpack.c.l.b16 %v163
    %v425 = vunpack.c.l.b16 %v164
    %v426 = vunpack.c.l.b16 %v165
    %v427 = vunpack.c.l.b16 %v166
    %v428 = vunpack.c.l.b16 %v167
    %v429 = vunpack.c.l.b16 %v168
    %v430 = vunpack.c.l.b16 %v169
    %v431 = vunpack.c.l.b16 %v170
    %v432 = vunpack.c.l.b16 %v171
    %v433 = vunpack.c.l.b16 %v172
    %v434 = vunpack.c.l.b16 %v173
    %v435 = vunpack.c.l.b16 %v174
    %v436 = vunpack.c.l.b16 %v175
    %v437 = vunpack.c.l.b16 %v176
    %v438 = vunpack.c.l.b16 %v177
    %v439 = vunpack.c.l.b16 %v178
    %v440 = vunpack.c.l.b16 %v179
    %v441 = vunpack.c.l.b16 %v180
    %v442 = vunpack.c.l.b16 %v181
    %v443 = vunpack.c.l.b16 %v182
    %v444 = vunpack.c.l.b16 %v183
    %v445 = vunpack.c.l.b16 %v184
    %v446 = vunpack.c.l.b16 %v185
    %v447 = vunpack.c.l.b16 %v186
    %v448 = vunpack.c.l.b16 %v187
    %v449 = vunpack.c.l.b16 %v188
    %v450 = vunpack.c.l.b16 %v189
    %v451 = vunpack.c.l.b16 %v190
    %v452 = vunpack.c.l.b16 %v191
    %v453 = vunpack.c.l.b16 %v192
    %v454 = vunpack.c.l.b16 %v193
    %v455 = vunpack.c.l.b16 %v194
    %v456 = vunpack.c.l.b16 %v195
    %v457 = vunpack.c.l.b16 %v196
    %v458 = vunpack.c.l.b16 %v197
    %v459 = vpack.c.b16 %v332, %v331
    %v460 = vpack.c.b16 %v334, %v333
    %v461 = vpack.c.b16 %v336, %v335
    %v462 = vpack.c.b16 %v338, %v337
    %v463 = vpack.c.b16 %v340, %v339
    %v464 = vpack.c.b16 %v342, %v341
    %v465 = vpack.c.b16 %v344, %v343
    %v466 = vpack.c.b16 %v346, %v345
    %v467 = vpack.c.b16 %v348, %v347
    %v468 = vpack.c.b16 %v350, %v349
    %v469 = vpack.c.b16 %v352, %v351
    %v470 = vpack.c.b16 %v354, %v353
    %v471 = vpack.c.b16 %v356, %v355
    %v472 = vpack.c.b16 %v358, %v357
    %v473 = vpack.c.b16 %v360, %v359
    %v474 = vpack.c.b16 %v362, %v361
    %v475 = vpack.c.b16 %v364, %v363
    %v476 = vpack.c.b16 %v366, %v365
    %v477 = vpack.c.b16 %v368, %v367
    %v478 = vpack.c.b16 %v370, %v369
    %v479 = vpack.c.b16 %v372, %v371
    %v480 = vpack.c.b16 %v374, %v373
    %v481 = vpack.c.b16 %v376, %v375
    %v482 = vpack.c.b16 %v378, %v377
    %v483 = vpack.c.b16 %v380, %v379
    %v484 = vpack.c.b16 %v382, %v381
    %v485 = vpack.c.b16 %v384, %v383
    %v486 = vpack.c.b16 %v386, %v385
    %v487 = vpack.c.b16 %v388, %v387
    %v488 = vpack.c.b16 %v390, %v389
    %v489 = vpack.c.b16 %v392, %v391
    %v490 = vpack.c.b16 %v394, %v393
    %v491 = vpack.c.b16 %v396, %v395
    %v492 = vpack.c.b16 %v398, %v397
    %v493 = vpack.c.b16 %v400, %v399
    %v494 = vpack.c.b16 %v402, %v401
    %v495 = vpack.c.b16 %v404, %v403
    %v496 = vpack.c.b16 %v406, %v405
    %v497 = vpack.c.b16 %v408, %v407
    %v498 = vpack.c.b16 %v410, %v409
    %v499 = vpack.c.b16 %v412, %v411
    %v500 = vpack.c.b16 %v414, %v413
    %v501 = vpack.c.b16 %v416, %v415
    %v502 = vpack.c.b16 %v418, %v417
    %v503 = vpack.c.b16 %v420, %v419
    %v504 = vpack.c.b16 %v422, %v421
    %v505 = vpack.c.b16 %v424, %v423
    %v506 = vpack.c.b16 %v426, %v425
    %v507 = vpack.c.b16 %v428, %v427
    %v508 = vpack.c.b16 %v430, %v429
    %v509 = vpack.c.b16 %v432, %v431
    %v510 = vpack.c.b16 %v434, %v433
    %v511 = vpack.c.b16 %v436, %v435
    %v512 = vpack.c.b16 %v438, %v437
    %v513 = vpack.c.b16 %v440, %v439
    %v514 = vpack.c.b16 %v442, %v441
    %v515 = vpack.c.b16 %v444, %v443
    %v516 = vpack.c.b16 %v446, %v445
    %v517 = vpack.c.b16 %v448, %v447
    %v518 = vpack.c.b16 %v450, %v449
    %v519 = vpack.c.b16 %v452, %v451
    %v520 = vpack.c.b16 %v454, %v453
    %v521 = vpack.c.b16 %v456, %v455
    %v522 = vpack.c.b16 %v458, %v457
    %587 = vmatprep.subr.bf16.mxu0 0
    %588 = vmatpush1.bf16.msra.mxu0 %v459
    %589 = vmatprep.subr.bf16.mxu0 0
    %590 = vmatpush1.bf16.msra.mxu0 %v460
    %591 = vmatprep.subr.bf16.mxu0 0
    %592 = vmatpush1.bf16.msra.mxu0 %v461
    %593 = vmatprep.subr.bf16.mxu0 0
    %594 = vmatpush1.bf16.msra.mxu0 %v462
    %595 = vmatprep.subr.bf16.mxu0 0
    %596 = vmatpush1.bf16.msra.mxu0 %v463
    %597 = vmatprep.subr.bf16.mxu0 0
    %598 = vmatpush1.bf16.msra.mxu0 %v464
    %599 = vmatprep.subr.bf16.mxu0 0
    %600 = vmatpush1.bf16.msra.mxu0 %v465
    %601 = vmatprep.subr.bf16.mxu0 0
    %602 = vmatpush1.bf16.msra.mxu0 %v466
    %603 = vmatprep.subr.bf16.mxu0 0
    %604 = vmatpush1.bf16.msra.mxu0 %v467
    %605 = vmatprep.subr.bf16.mxu0 0
    %606 = vmatpush1.bf16.msra.mxu0 %v468
    %607 = vmatprep.subr.bf16.mxu0 0
    %608 = vmatpush1.bf16.msra.mxu0 %v469
    %609 = vmatprep.subr.bf16.mxu0 0
    %610 = vmatpush1.bf16.msra.mxu0 %v470
    %611 = vmatprep.subr.bf16.mxu0 0
    %612 = vmatpush1.bf16.msra.mxu0 %v471
    %613 = vmatprep.subr.bf16.mxu0 0
    %614 = vmatpush1.bf16.msra.mxu0 %v472
    %615 = vmatprep.subr.bf16.mxu0 0
    %616 = vmatpush1.bf16.msra.mxu0 %v473
    %617 = vmatprep.subr.bf16.mxu0 0
    %618 = vmatpush1.bf16.msra.mxu0 %v474
    %619 = vmatprep.mubr.bf16.mxu0 %v63
    %620 = vmatmul.mubr.bf16.gmra.mrb[0].mxu0 %v62
    %v621 = vpop.f32.mrb[0].mxu0
    %v622 = vadd.f32 %v202, %v621
    %v623 = vpop.f32.mrb[0].mxu0
    %v624 = vpop.f32.mrb[0].mxu0
    %v625 = vpop.f32.mrb[0].mxu0
    %626 = vdwg.mxu0
    %627 = vmatprep.subr.bf16.mxu0 0
    %628 = vmatpush1.bf16.msra.mxu0 %v475
    %629 = vmatprep.subr.bf16.mxu0 0
    %630 = vmatpush1.bf16.msra.mxu0 %v476
    %631 = vmatprep.subr.bf16.mxu0 0
    %632 = vmatpush1.bf16.msra.mxu0 %v477
    %633 = vmatprep.subr.bf16.mxu0 0
    %634 = vmatpush1.bf16.msra.mxu0 %v478
    %635 = vmatprep.subr.bf16.mxu0 0
    %636 = vmatpush1.bf16.msra.mxu0 %v479
    %637 = vmatprep.subr.bf16.mxu0 0
    %638 = vmatpush1.bf16.msra.mxu0 %v480
    %639 = vmatprep.subr.bf16.mxu0 0
    %640 = vmatpush1.bf16.msra.mxu0 %v481
    %641 = vmatprep.subr.bf16.mxu0 0
    %642 = vmatpush1.bf16.msra.mxu0 %v482
    %643 = vmatprep.subr.bf16.mxu0 0
    %644 = vmatpush1.bf16.msra.mxu0 %v483
    %645 = vmatprep.subr.bf16.mxu0 0
    %646 = vmatpush1.bf16.msra.mxu0 %v484
    %647 = vmatprep.subr.bf16.mxu0 0
    %648 = vmatpush1.bf16.msra.mxu0 %v485
    %649 = vmatprep.subr.bf16.mxu0 0
    %650 = vmatpush1.bf16.msra.mxu0 %v486
    %651 = vmatprep.subr.bf16.mxu0 0
    %652 = vmatpush1.bf16.msra.mxu0 %v487
    %653 = vmatprep.subr.bf16.mxu0 0
    %654 = vmatpush1.bf16.msra.mxu0 %v488
    %655 = vmatprep.subr.bf16.mxu0 0
    %656 = vmatpush1.bf16.msra.mxu0 %v489
    %657 = vmatprep.subr.bf16.mxu0 0
    %658 = vmatpush1.bf16.msra.mxu0 %v490
    %659 = vmatprep.mubr.bf16.mxu0 %v65
    %660 = vmatmul.mubr.bf16.gmra.mrb[0].mxu0 %v64
    %v661 = vpop.f32.mrb[0].mxu0
    %v662 = vadd.f32 %v622, %v661
    %v663 = vpop.f32.mrb[0].mxu0
    %v664 = vpop.f32.mrb[0].mxu0
    %v665 = vpop.f32.mrb[0].mxu0
    %666 = vdwg.mxu0
    %667 = vmatprep.subr.bf16.mxu0 0
    %668 = vmatpush1.bf16.msra.mxu0 %v491
    %669 = vmatprep.subr.bf16.mxu0 0
    %670 = vmatpush1.bf16.msra.mxu0 %v492
    %671 = vmatprep.subr.bf16.mxu0 0
    %672 = vmatpush1.bf16.msra.mxu0 %v493
    %673 = vmatprep.subr.bf16.mxu0 0
    %674 = vmatpush1.bf16.msra.mxu0 %v494
    %675 = vmatprep.subr.bf16.mxu0 0
    %676 = vmatpush1.bf16.msra.mxu0 %v495
    %677 = vmatprep.subr.bf16.mxu0 0
    %678 = vmatpush1.bf16.msra.mxu0 %v496
    %679 = vmatprep.subr.bf16.mxu0 0
    %680 = vmatpush1.bf16.msra.mxu0 %v497
    %681 = vmatprep.subr.bf16.mxu0 0
    %682 = vmatpush1.bf16.msra.mxu0 %v498
    %683 = vmatprep.subr.bf16.mxu0 0
    %684 = vmatpush1.bf16.msra.mxu0 %v499
    %685 = vmatprep.subr.bf16.mxu0 0
    %686 = vmatpush1.bf16.msra.mxu0 %v500
    %687 = vmatprep.subr.bf16.mxu0 0
    %688 = vmatpush1.bf16.msra.mxu0 %v501
    %689 = vmatprep.subr.bf16.mxu0 0
    %690 = vmatpush1.bf16.msra.mxu0 %v502
    %691 = vmatprep.subr.bf16.mxu0 0
    %692 = vmatpush1.bf16.msra.mxu0 %v503
    %693 = vmatprep.subr.bf16.mxu0 0
    %694 = vmatpush1.bf16.msra.mxu0 %v504
    %695 = vmatprep.subr.bf16.mxu0 0
    %696 = vmatpush1.bf16.msra.mxu0 %v505
    %697 = vmatprep.subr.bf16.mxu0 0
    %698 = vmatpush1.bf16.msra.mxu0 %v506
    %699 = vmatprep.mubr.bf16.mxu0 %v67
    %700 = vmatmul.mubr.bf16.gmra.mrb[0].mxu0 %v66
    %v701 = vpop.f32.mrb[0].mxu0
    %v702 = vadd.f32 %v662, %v701
    %v703 = vpop.f32.mrb[0].mxu0
    %v704 = vpop.f32.mrb[0].mxu0
    %v705 = vpop.f32.mrb[0].mxu0
    %706 = vdwg.mxu0
    %707 = vmatprep.subr.bf16.mxu0 0
    %708 = vmatpush1.bf16.msra.mxu0 %v507
    %709 = vmatprep.subr.bf16.mxu0 0
    %710 = vmatpush1.bf16.msra.mxu0 %v508
    %711 = vmatprep.subr.bf16.mxu0 0
    %712 = vmatpush1.bf16.msra.mxu0 %v509
    %713 = vmatprep.subr.bf16.mxu0 0
    %714 = vmatpush1.bf16.msra.mxu0 %v510
    %715 = vmatprep.subr.bf16.mxu0 0
    %716 = vmatpush1.bf16.msra.mxu0 %v511
    %717 = vmatprep.subr.bf16.mxu0 0
    %718 = vmatpush1.bf16.msra.mxu0 %v512
    %719 = vmatprep.subr.bf16.mxu0 0
    %720 = vmatpush1.bf16.msra.mxu0 %v513
    %721 = vmatprep.subr.bf16.mxu0 0
    %722 = vmatpush1.bf16.msra.mxu0 %v514
    %723 = vmatprep.subr.bf16.mxu0 0
    %724 = vmatpush1.bf16.msra.mxu0 %v515
    %725 = vmatprep.subr.bf16.mxu0 0
    %726 = vmatpush1.bf16.msra.mxu0 %v516
    %727 = vmatprep.subr.bf16.mxu0 0
    %728 = vmatpush1.bf16.msra.mxu0 %v517
    %729 = vmatprep.subr.bf16.mxu0 0
    %730 = vmatpush1.bf16.msra.mxu0 %v518
    %731 = vmatprep.subr.bf16.mxu0 0
    %732 = vmatpush1.bf16.msra.mxu0 %v519
    %733 = vmatprep.subr.bf16.mxu0 0
    %734 = vmatpush1.bf16.msra.mxu0 %v520
    %735 = vmatprep.subr.bf16.mxu0 0
    %736 = vmatpush1.bf16.msra.mxu0 %v521
    %737 = vmatprep.subr.bf16.mxu0 0
    %738 = vmatpush1.bf16.msra.mxu0 %v522
    %739 = vmatprep.mubr.bf16.mxu0 %v69
    %740 = vmatmul.mubr.bf16.gmra.mrb[0].mxu0 %v68
    %v741 = vpop.f32.mrb[0].mxu0
    %v742 = vadd.f32 %v702, %v741
    %v743 = vpop.f32.mrb[0].mxu0
    %v744 = vpop.f32.mrb[0].mxu0
    %v745 = vpop.f32.mrb[0].mxu0
    %746 = vdwg.mxu0
    %v747 = vmax.f32 %v742, 0.0
    %v748 = vpack.c.bf16 %v747, %v747
    %v749 = vld [vmem:[%s2] sm:$0xf]
    %v750 = vld [vmem:[%s2 + $0x4] sm:$0xf]
    %v751 = vld [vmem:[%s2 + $0x8] sm:$0xf]
    %v752 = vld [vmem:[%s2 + $0xc] sm:$0xf]
    %v753 = vld [vmem:[%s2 + $0x10] sm:$0xf]
    %v754 = vld [vmem:[%s2 + $0x14] sm:$0xf]
    %v755 = vld [vmem:[%s2 + $0x18] sm:$0xf]
    %v756 = vld [vmem:[%s2 + $0x1c] sm:$0xf]
    %v757 = vld [vmem:[%s2 + $0x20] sm:$0xf]
    %v758 = vld [vmem:[%s2 + $0x24] sm:$0xf]
    %v759 = vld [vmem:[%s2 + $0x28] sm:$0xf]
    %v760 = vld [vmem:[%s2 + $0x2c] sm:$0xf]
    %v761 = vld [vmem:[%s2 + $0x30] sm:$0xf]
    %v762 = vld [vmem:[%s2 + $0x34] sm:$0xf]
    %v763 = vld [vmem:[%s2 + $0x38] sm:$0xf]
    %v764 = vld [vmem:[%s2 + $0x3c] sm:$0xf]
    %v765 = vld [vmem:[%s5 + $0x1] sm:$0x1]
    %v766 = vlaneseq
    %v767 = vshrl.u32 %v766, 7
    %v768 = vsub.s32 0, %v767
    %v769 = vrot.slane %v765, %v768
    %v786 = vunpack.c.l.b16 %v749
    %v787 = vunpack.c.l.b16 %v750
    %v788 = vunpack.c.l.b16 %v751
    %v789 = vunpack.c.l.b16 %v752
    %v790 = vunpack.c.l.b16 %v753
    %v791 = vunpack.c.l.b16 %v754
    %v792 = vunpack.c.l.b16 %v755
    %v793 = vunpack.c.l.b16 %v756
    %v794 = vunpack.c.l.b16 %v757
    %v795 = vunpack.c.l.b16 %v758
    %v796 = vunpack.c.l.b16 %v759
    %v797 = vunpack.c.l.b16 %v760
    %v798 = vunpack.c.l.b16 %v761
    %v799 = vunpack.c.l.b16 %v762
    %v800 = vunpack.c.l.b16 %v763
    %v801 = vunpack.c.l.b16 %v764
    %v802 = vpack.c.b16 %v787, %v786
    %v803 = vpack.c.b16 %v789, %v788
    %v804 = vpack.c.b16 %v791, %v790
    %v805 = vpack.c.b16 %v793, %v792
    %v806 = vpack.c.b16 %v795, %v794
    %v807 = vpack.c.b16 %v797, %v796
    %v808 = vpack.c.b16 %v799, %v798
    %v809 = vpack.c.b16 %v801, %v800
    %818 = vmatprep.subr.bf16.mxu0 0
    %819 = vmatpush1.bf16.msra.mxu0 %v802
    %820 = vmatprep.subr.bf16.mxu0 0
    %821 = vmatpush1.bf16.msra.mxu0 %v803
    %822 = vmatprep.subr.bf16.mxu0 0
    %823 = vmatpush1.bf16.msra.mxu0 %v804
    %824 = vmatprep.subr.bf16.mxu0 0
    %825 = vmatpush1.bf16.msra.mxu0 %v805
    %826 = vmatprep.subr.bf16.mxu0 0
    %827 = vmatpush1.bf16.msra.mxu0 %v806
    %828 = vmatprep.subr.bf16.mxu0 0
    %829 = vmatpush1.bf16.msra.mxu0 %v807
    %830 = vmatprep.subr.bf16.mxu0 0
    %831 = vmatpush1.bf16.msra.mxu0 %v808
    %832 = vmatprep.subr.bf16.mxu0 0
    %833 = vmatpush1.bf16.msra.mxu0 %v809
    %834 = vmatprep.subr.bf16.mxu0 0
    %835 = vmatpush1.bf16.msra.mxu0 0
    %836 = vmatprep.subr.bf16.mxu0 0
    %837 = vmatpush1.bf16.msra.mxu0 0
    %838 = vmatprep.subr.bf16.mxu0 0
    %839 = vmatpush1.bf16.msra.mxu0 0
    %840 = vmatprep.subr.bf16.mxu0 0
    %841 = vmatpush1.bf16.msra.mxu0 0
    %842 = vmatprep.subr.bf16.mxu0 0
    %843 = vmatpush1.bf16.msra.mxu0 0
    %844 = vmatprep.subr.bf16.mxu0 0
    %845 = vmatpush1.bf16.msra.mxu0 0
    %846 = vmatprep.subr.bf16.mxu0 0
    %847 = vmatpush1.bf16.msra.mxu0 0
    %848 = vmatprep.subr.bf16.mxu0 0
    %849 = vmatpush1.bf16.msra.mxu0 0
    %850 = vmatprep.mubr.bf16.mxu0 0
    %851 = vmatmul.mubr.bf16.gmra.mrb[0].mxu0 %v748
    %v852 = vpop.f32.mrb[0].mxu0
    %v853 = vadd.f32 %v769, %v852
    %v854 = vpop.f32.mrb[0].mxu0
    %v855 = vpop.f32.mrb[0].mxu0
    %v856 = vpop.f32.mrb[0].mxu0
    %857 = vdwg.mxu0
    %v858 = vpack.c.bf16 %v853, %v853
    %v859 = vld [vmem:[%s3] sm:$0xf]
    %v860 = vld [vmem:[%s3 + $0x4] sm:$0xf]
    %v861 = vld [vmem:[%s3 + $0x8] sm:$0xf]
    %v862 = vld [vmem:[%s3 + $0xc] sm:$0xf]
    %v863 = vld [vmem:[%s3 + $0x10] sm:$0xf]
    %v864 = vld [vmem:[%s3 + $0x14] sm:$0xf]
    %v865 = vld [vmem:[%s3 + $0x18] sm:$0xf]
    %v866 = vld [vmem:[%s3 + $0x1c] sm:$0xf]
    %v867 = vld [vmem:[%s3 + $0x20] sm:$0xf]
    %v868 = vld [vmem:[%s3 + $0x24] sm:$0xf]
    %v869 = vld [vmem:[%s3 + $0x28] sm:$0xf]
    %v870 = vld [vmem:[%s3 + $0x2c] sm:$0xf]
    %v871 = vld [vmem:[%s3 + $0x30] sm:$0xf]
    %v872 = vld [vmem:[%s3 + $0x34] sm:$0xf]
    %v873 = vld [vmem:[%s3 + $0x38] sm:$0xf]
    %v874 = vld [vmem:[%s3 + $0x3c] sm:$0xf]
    %v875 = vld [vmem:[%s5 + $0x2] sm:$0x1]
    %v876 = vlaneseq
    %v877 = vshrl.u32 %v876, 7
    %v878 = vsub.s32 0, %v877
    %v879 = vrot.slane %v875, %v878
    %v896 = vunpack.c.l.b16 %v859
    %v897 = vunpack.c.l.b16 %v860
    %v898 = vunpack.c.l.b16 %v861
    %v899 = vunpack.c.l.b16 %v862
    %v900 = vunpack.c.l.b16 %v863
    %v901 = vunpack.c.l.b16 %v864
    %v902 = vunpack.c.l.b16 %v865
    %v903 = vunpack.c.l.b16 %v866
    %v904 = vunpack.c.l.b16 %v867
    %v905 = vunpack.c.l.b16 %v868
    %v906 = vunpack.c.l.b16 %v869
    %v907 = vunpack.c.l.b16 %v870
    %v908 = vunpack.c.l.b16 %v871
    %v909 = vunpack.c.l.b16 %v872
    %v910 = vunpack.c.l.b16 %v873
    %v911 = vunpack.c.l.b16 %v874
    %v912 = vpack.c.b16 %v897, %v896
    %v913 = vpack.c.b16 %v899, %v898
    %v914 = vpack.c.b16 %v901, %v900
    %v915 = vpack.c.b16 %v903, %v902
    %v916 = vpack.c.b16 %v905, %v904
    %v917 = vpack.c.b16 %v907, %v906
    %v918 = vpack.c.b16 %v909, %v908
    %v919 = vpack.c.b16 %v911, %v910
    %928 = vmatprep.subr.bf16.mxu0 0
    %929 = vmatpush1.bf16.msra.mxu0 %v912
    %930 = vmatprep.subr.bf16.mxu0 0
    %931 = vmatpush1.bf16.msra.mxu0 %v913
    %932 = vmatprep.subr.bf16.mxu0 0
    %933 = vmatpush1.bf16.msra.mxu0 %v914
    %934 = vmatprep.subr.bf16.mxu0 0
    %935 = vmatpush1.bf16.msra.mxu0 %v915
    %936 = vmatprep.subr.bf16.mxu0 0
    %937 = vmatpush1.bf16.msra.mxu0 %v916
    %938 = vmatprep.subr.bf16.mxu0 0
    %939 = vmatpush1.bf16.msra.mxu0 %v917
    %940 = vmatprep.subr.bf16.mxu0 0
    %941 = vmatpush1.bf16.msra.mxu0 %v918
    %942 = vmatprep.subr.bf16.mxu0 0
    %943 = vmatpush1.bf16.msra.mxu0 %v919
    %944 = vmatprep.subr.bf16.mxu0 0
    %945 = vmatpush1.bf16.msra.mxu0 0
    %946 = vmatprep.subr.bf16.mxu0 0
    %947 = vmatpush1.bf16.msra.mxu0 0
    %948 = vmatprep.subr.bf16.mxu0 0
    %949 = vmatpush1.bf16.msra.mxu0 0
    %950 = vmatprep.subr.bf16.mxu0 0
    %951 = vmatpush1.bf16.msra.mxu0 0
    %952 = vmatprep.subr.bf16.mxu0 0
    %953 = vmatpush1.bf16.msra.mxu0 0
    %954 = vmatprep.subr.bf16.mxu0 0
    %955 = vmatpush1.bf16.msra.mxu0 0
    %956 = vmatprep.subr.bf16.mxu0 0
    %957 = vmatpush1.bf16.msra.mxu0 0
    %958 = vmatprep.subr.bf16.mxu0 0
    %959 = vmatpush1.bf16.msra.mxu0 0
    %960 = vmatprep.mubr.bf16.mxu0 0
    %961 = vmatmul.mubr.bf16.gmra.mrb[0].mxu0 %v858
    %v962 = vpop.f32.mrb[0].mxu0
    %v963 = vadd.f32 %v879, %v962
    %v964 = vpop.f32.mrb[0].mxu0
    %v965 = vpop.f32.mrb[0].mxu0
    %v966 = vpop.f32.mrb[0].mxu0
    %967 = vdwg.mxu0
    %v968 = vmax.f32 %v963, 0.0
    %v969 = vpack.c.bf16 %v968, %v968
    %v970 = vld [vmem:[#allocation4] sm:$0xff]
    %v971 = vld [vmem:[#allocation4 + $0x8] sm:$0xff]
    %v972 = vld [vmem:[#allocation4 + $0x10] sm:$0xff]
    %v973 = vld [vmem:[#allocation4 + $0x18] sm:$0xff]
    %v974 = vld [vmem:[#allocation4 + $0x20] sm:$0xff]
    %v975 = vld [vmem:[#allocation4 + $0x28] sm:$0xff]
    %v976 = vld [vmem:[#allocation4 + $0x30] sm:$0xff]
    %v977 = vld [vmem:[#allocation4 + $0x38] sm:$0xff]
    %v978 = vld [vmem:[#allocation4 + $0x40] sm:$0xff]
    %v979 = vld [vmem:[#allocation4 + $0x48] sm:$0xff]
    %v980 = vld [vmem:[#allocation4 + $0x50] sm:$0xff]
    %v981 = vld [vmem:[#allocation4 + $0x58] sm:$0xff]
    %v982 = vld [vmem:[#allocation4 + $0x60] sm:$0xff]
    %v983 = vld [vmem:[#allocation4 + $0x68] sm:$0xff]
    %v984 = vld [vmem:[#allocation4 + $0x70] sm:$0xff]
    %v985 = vld [vmem:[#allocation4 + $0x78] sm:$0xff]
    %v986 = vld [vmem:[#allocation4 + $0x80] sm:$0xff]
    %v987 = vld [vmem:[#allocation4 + $0x88] sm:$0xff]
    %v988 = vld [vmem:[#allocation4 + $0x90] sm:$0xff]
    %v989 = vld [vmem:[#allocation4 + $0x98] sm:$0xff]
    %v990 = vld [vmem:[#allocation4 + $0xa0] sm:$0xff]
    %v991 = vld [vmem:[#allocation4 + $0xa8] sm:$0xff]
    %v992 = vld [vmem:[#allocation4 + $0xb0] sm:$0xff]
    %v993 = vld [vmem:[#allocation4 + $0xb8] sm:$0xff]
    %v994 = vld [vmem:[#allocation4 + $0xc0] sm:$0xff]
    %v995 = vld [vmem:[#allocation4 + $0xc8] sm:$0xff]
    %v996 = vld [vmem:[#allocation4 + $0xd0] sm:$0xff]
    %v997 = vld [vmem:[#allocation4 + $0xd8] sm:$0xff]
    %v998 = vld [vmem:[#allocation4 + $0xe0] sm:$0xff]
    %v999 = vld [vmem:[#allocation4 + $0xe8] sm:$0xff]
    %v1000 = vld [vmem:[#allocation4 + $0xf0] sm:$0xff]
    %v1001 = vld [vmem:[#allocation4 + $0xf8] sm:$0xff]
    %v1002 = vld [vmem:[#allocation4 + $0x100] sm:$0xff]
    %v1003 = vld [vmem:[#allocation4 + $0x108] sm:$0xff]
    %v1004 = vld [vmem:[#allocation4 + $0x110] sm:$0xff]
    %v1005 = vld [vmem:[#allocation4 + $0x118] sm:$0xff]
    %v1006 = vld [vmem:[#allocation4 + $0x120] sm:$0xff]
    %v1007 = vld [vmem:[#allocation4 + $0x128] sm:$0xff]
    %v1008 = vld [vmem:[#allocation4 + $0x130] sm:$0xff]
    %v1009 = vld [vmem:[#allocation4 + $0x138] sm:$0xff]
    %v1010 = vld [vmem:[#allocation4 + $0x140] sm:$0xff]
    %v1011 = vld [vmem:[#allocation4 + $0x148] sm:$0xff]
    %v1012 = vld [vmem:[#allocation4 + $0x150] sm:$0xff]
    %v1013 = vld [vmem:[#allocation4 + $0x158] sm:$0xff]
    %v1014 = vld [vmem:[#allocation4 + $0x160] sm:$0xff]
    %v1015 = vld [vmem:[#allocation4 + $0x168] sm:$0xff]
    %v1016 = vld [vmem:[#allocation4 + $0x170] sm:$0xff]
    %v1017 = vld [vmem:[#allocation4 + $0x178] sm:$0xff]
    %v1018 = vld [vmem:[#allocation4 + $0x180] sm:$0xff]
    %v1019 = vld [vmem:[#allocation4 + $0x188] sm:$0xff]
    %v1020 = vld [vmem:[#allocation4 + $0x190] sm:$0xff]
    %v1021 = vld [vmem:[#allocation4 + $0x198] sm:$0xff]
    %v1022 = vld [vmem:[#allocation4 + $0x1a0] sm:$0xff]
    %v1023 = vld [vmem:[#allocation4 + $0x1a8] sm:$0xff]
    %v1024 = vld [vmem:[#allocation4 + $0x1b0] sm:$0xff]
    %v1025 = vld [vmem:[#allocation4 + $0x1b8] sm:$0xff]
    %v1026 = vld [vmem:[#allocation4 + $0x1c0] sm:$0xff]
    %v1027 = vld [vmem:[#allocation4 + $0x1c8] sm:$0xff]
    %v1028 = vld [vmem:[#allocation4 + $0x1d0] sm:$0xff]
    %v1029 = vld [vmem:[#allocation4 + $0x1d8] sm:$0xff]
    %v1030 = vld [vmem:[#allocation4 + $0x1e0] sm:$0xff]
    %v1031 = vld [vmem:[#allocation4 + $0x1e8] sm:$0xff]
    %v1032 = vld [vmem:[#allocation4 + $0x1f0] sm:$0xff]
    %v1033 = vld [vmem:[#allocation4 + $0x1f8] sm:$0xff]
    %s1034 = scalar_lea.vmem %s5, 3
    %v1035 = vld [vmem:[%s1034] ss:$4 sm:$0xff]
    %v1037 = vlaneseq
    %v1038 = vshrl.u32 %v1037, 7
    %v1039 = vsub.s32 0, %v1038
    %v1040 = vrot.slane %v1035, %v1039
    %v1041 = vlaneseq
    %v1042 = vshrl.u32 %v1041, 7
    %v1043 = vsub.s32 1, %v1042
    %v1044 = vrot.slane %v1035, %v1043
    %v1045 = vlaneseq
    %v1046 = vshrl.u32 %v1045, 7
    %v1047 = vsub.s32 2, %v1046
    %v1048 = vrot.slane %v1035, %v1047
    %v1049 = vlaneseq
    %v1050 = vshrl.u32 %v1049, 7
    %v1051 = vsub.s32 3, %v1050
    %v1052 = vrot.slane %v1035, %v1051
    %v1053 = vlaneseq
    %v1054 = vshrl.u32 %v1053, 7
    %v1055 = vsub.s32 4, %v1054
    %v1056 = vrot.slane %v1035, %v1055
    %v1057 = vlaneseq
    %v1058 = vshrl.u32 %v1057, 7
    %v1059 = vsub.s32 5, %v1058
    %v1060 = vrot.slane %v1035, %v1059
    %v1061 = vlaneseq
    %v1062 = vshrl.u32 %v1061, 7
    %v1063 = vsub.s32 6, %v1062
    %v1064 = vrot.slane %v1035, %v1063
    %v1065 = vlaneseq
    %v1066 = vshrl.u32 %v1065, 7
    %v1067 = vsub.s32 7, %v1066
    %v1068 = vrot.slane %v1035, %v1067
    %v1141 = vunpack.c.l.b16 %v970
    %v1142 = vunpack.c.h.b16 %v970
    %v1143 = vunpack.c.l.b16 %v971
    %v1144 = vunpack.c.h.b16 %v971
    %v1145 = vunpack.c.l.b16 %v972
    %v1146 = vunpack.c.h.b16 %v972
    %v1147 = vunpack.c.l.b16 %v973
    %v1148 = vunpack.c.h.b16 %v973
    %v1149 = vunpack.c.l.b16 %v974
    %v1150 = vunpack.c.h.b16 %v974
    %v1151 = vunpack.c.l.b16 %v975
    %v1152 = vunpack.c.h.b16 %v975
    %v1153 = vunpack.c.l.b16 %v976
    %v1154 = vunpack.c.h.b16 %v976
    %v1155 = vunpack.c.l.b16 %v977
    %v1156 = vunpack.c.h.b16 %v977
    %v1157 = vunpack.c.l.b16 %v978
    %v1158 = vunpack.c.h.b16 %v978
    %v1159 = vunpack.c.l.b16 %v979
    %v1160 = vunpack.c.h.b16 %v979
    %v1161 = vunpack.c.l.b16 %v980
    %v1162 = vunpack.c.h.b16 %v980
    %v1163 = vunpack.c.l.b16 %v981
    %v1164 = vunpack.c.h.b16 %v981
    %v1165 = vunpack.c.l.b16 %v982
    %v1166 = vunpack.c.h.b16 %v982
    %v1167 = vunpack.c.l.b16 %v983
    %v1168 = vunpack.c.h.b16 %v983
    %v1169 = vunpack.c.l.b16 %v984
    %v1170 = vunpack.c.h.b16 %v984
    %v1171 = vunpack.c.l.b16 %v985
    %v1172 = vunpack.c.h.b16 %v985
    %v1173 = vunpack.c.l.b16 %v986
    %v1174 = vunpack.c.h.b16 %v986
    %v1175 = vunpack.c.l.b16 %v987
    %v1176 = vunpack.c.h.b16 %v987
    %v1177 = vunpack.c.l.b16 %v988
    %v1178 = vunpack.c.h.b16 %v988
    %v1179 = vunpack.c.l.b16 %v989
    %v1180 = vunpack.c.h.b16 %v989
    %v1181 = vunpack.c.l.b16 %v990
    %v1182 = vunpack.c.h.b16 %v990
    %v1183 = vunpack.c.l.b16 %v991
    %v1184 = vunpack.c.h.b16 %v991
    %v1185 = vunpack.c.l.b16 %v992
    %v1186 = vunpack.c.h.b16 %v992
    %v1187 = vunpack.c.l.b16 %v993
    %v1188 = vunpack.c.h.b16 %v993
    %v1189 = vunpack.c.l.b16 %v994
    %v1190 = vunpack.c.h.b16 %v994
    %v1191 = vunpack.c.l.b16 %v995
    %v1192 = vunpack.c.h.b16 %v995
    %v1193 = vunpack.c.l.b16 %v996
    %v1194 = vunpack.c.h.b16 %v996
    %v1195 = vunpack.c.l.b16 %v997
    %v1196 = vunpack.c.h.b16 %v997
    %v1197 = vunpack.c.l.b16 %v998
    %v1198 = vunpack.c.h.b16 %v998
    %v1199 = vunpack.c.l.b16 %v999
    %v1200 = vunpack.c.h.b16 %v999
    %v1201 = vunpack.c.l.b16 %v1000
    %v1202 = vunpack.c.h.b16 %v1000
    %v1203 = vunpack.c.l.b16 %v1001
    %v1204 = vunpack.c.h.b16 %v1001
    %v1205 = vunpack.c.l.b16 %v1002
    %v1206 = vunpack.c.h.b16 %v1002
    %v1207 = vunpack.c.l.b16 %v1003
    %v1208 = vunpack.c.h.b16 %v1003
    %v1209 = vunpack.c.l.b16 %v1004
    %v1210 = vunpack.c.h.b16 %v1004
    %v1211 = vunpack.c.l.b16 %v1005
    %v1212 = vunpack.c.h.b16 %v1005
    %v1213 = vunpack.c.l.b16 %v1006
    %v1214 = vunpack.c.h.b16 %v1006
    %v1215 = vunpack.c.l.b16 %v1007
    %v1216 = vunpack.c.h.b16 %v1007
    %v1217 = vunpack.c.l.b16 %v1008
    %v1218 = vunpack.c.h.b16 %v1008
    %v1219 = vunpack.c.l.b16 %v1009
    %v1220 = vunpack.c.h.b16 %v1009
    %v1221 = vunpack.c.l.b16 %v1010
    %v1222 = vunpack.c.h.b16 %v1010
    %v1223 = vunpack.c.l.b16 %v1011
    %v1224 = vunpack.c.h.b16 %v1011
    %v1225 = vunpack.c.l.b16 %v1012
    %v1226 = vunpack.c.h.b16 %v1012
    %v1227 = vunpack.c.l.b16 %v1013
    %v1228 = vunpack.c.h.b16 %v1013
    %v1229 = vunpack.c.l.b16 %v1014
    %v1230 = vunpack.c.h.b16 %v1014
    %v1231 = vunpack.c.l.b16 %v1015
    %v1232 = vunpack.c.h.b16 %v1015
    %v1233 = vunpack.c.l.b16 %v1016
    %v1234 = vunpack.c.h.b16 %v1016
    %v1235 = vunpack.c.l.b16 %v1017
    %v1236 = vunpack.c.h.b16 %v1017
    %v1237 = vunpack.c.l.b16 %v1018
    %v1238 = vunpack.c.h.b16 %v1018
    %v1239 = vunpack.c.l.b16 %v1019
    %v1240 = vunpack.c.h.b16 %v1019
    %v1241 = vunpack.c.l.b16 %v1020
    %v1242 = vunpack.c.h.b16 %v1020
    %v1243 = vunpack.c.l.b16 %v1021
    %v1244 = vunpack.c.h.b16 %v1021
    %v1245 = vunpack.c.l.b16 %v1022
    %v1246 = vunpack.c.h.b16 %v1022
    %v1247 = vunpack.c.l.b16 %v1023
    %v1248 = vunpack.c.h.b16 %v1023
    %v1249 = vunpack.c.l.b16 %v1024
    %v1250 = vunpack.c.h.b16 %v1024
    %v1251 = vunpack.c.l.b16 %v1025
    %v1252 = vunpack.c.h.b16 %v1025
    %v1253 = vunpack.c.l.b16 %v1026
    %v1254 = vunpack.c.h.b16 %v1026
    %v1255 = vunpack.c.l.b16 %v1027
    %v1256 = vunpack.c.h.b16 %v1027
    %v1257 = vunpack.c.l.b16 %v1028
    %v1258 = vunpack.c.h.b16 %v1028
    %v1259 = vunpack.c.l.b16 %v1029
    %v1260 = vunpack.c.h.b16 %v1029
    %v1261 = vunpack.c.l.b16 %v1030
    %v1262 = vunpack.c.h.b16 %v1030
    %v1263 = vunpack.c.l.b16 %v1031
    %v1264 = vunpack.c.h.b16 %v1031
    %v1265 = vunpack.c.l.b16 %v1032
    %v1266 = vunpack.c.h.b16 %v1032
    %v1267 = vunpack.c.l.b16 %v1033
    %v1268 = vunpack.c.h.b16 %v1033
    %v1269 = vpack.c.b16 %v1149, %v1141
    %v1270 = vpack.c.b16 %v1150, %v1142
    %v1271 = vpack.c.b16 %v1151, %v1143
    %v1272 = vpack.c.b16 %v1152, %v1144
    %v1273 = vpack.c.b16 %v1153, %v1145
    %v1274 = vpack.c.b16 %v1154, %v1146
    %v1275 = vpack.c.b16 %v1155, %v1147
    %v1276 = vpack.c.b16 %v1156, %v1148
    %v1277 = vpack.c.b16 %v1165, %v1157
    %v1278 = vpack.c.b16 %v1166, %v1158
    %v1279 = vpack.c.b16 %v1167, %v1159
    %v1280 = vpack.c.b16 %v1168, %v1160
    %v1281 = vpack.c.b16 %v1169, %v1161
    %v1282 = vpack.c.b16 %v1170, %v1162
    %v1283 = vpack.c.b16 %v1171, %v1163
    %v1284 = vpack.c.b16 %v1172, %v1164
    %v1285 = vpack.c.b16 %v1181, %v1173
    %v1286 = vpack.c.b16 %v1182, %v1174
    %v1287 = vpack.c.b16 %v1183, %v1175
    %v1288 = vpack.c.b16 %v1184, %v1176
    %v1289 = vpack.c.b16 %v1185, %v1177
    %v1290 = vpack.c.b16 %v1186, %v1178
    %v1291 = vpack.c.b16 %v1187, %v1179
    %v1292 = vpack.c.b16 %v1188, %v1180
    %v1293 = vpack.c.b16 %v1197, %v1189
    %v1294 = vpack.c.b16 %v1198, %v1190
    %v1295 = vpack.c.b16 %v1199, %v1191
    %v1296 = vpack.c.b16 %v1200, %v1192
    %v1297 = vpack.c.b16 %v1201, %v1193
    %v1298 = vpack.c.b16 %v1202, %v1194
    %v1299 = vpack.c.b16 %v1203, %v1195
    %v1300 = vpack.c.b16 %v1204, %v1196
    %v1301 = vpack.c.b16 %v1213, %v1205
    %v1302 = vpack.c.b16 %v1214, %v1206
    %v1303 = vpack.c.b16 %v1215, %v1207
    %v1304 = vpack.c.b16 %v1216, %v1208
    %v1305 = vpack.c.b16 %v1217, %v1209
    %v1306 = vpack.c.b16 %v1218, %v1210
    %v1307 = vpack.c.b16 %v1219, %v1211
    %v1308 = vpack.c.b16 %v1220, %v1212
    %v1309 = vpack.c.b16 %v1229, %v1221
    %v1310 = vpack.c.b16 %v1230, %v1222
    %v1311 = vpack.c.b16 %v1231, %v1223
    %v1312 = vpack.c.b16 %v1232, %v1224
    %v1313 = vpack.c.b16 %v1233, %v1225
    %v1314 = vpack.c.b16 %v1234, %v1226
    %v1315 = vpack.c.b16 %v1235, %v1227
    %v1316 = vpack.c.b16 %v1236, %v1228
    %v1317 = vpack.c.b16 %v1245, %v1237
    %v1318 = vpack.c.b16 %v1246, %v1238
    %v1319 = vpack.c.b16 %v1247, %v1239
    %v1320 = vpack.c.b16 %v1248, %v1240
    %v1321 = vpack.c.b16 %v1249, %v1241
    %v1322 = vpack.c.b16 %v1250, %v1242
    %v1323 = vpack.c.b16 %v1251, %v1243
    %v1324 = vpack.c.b16 %v1252, %v1244
    %v1325 = vpack.c.b16 %v1261, %v1253
    %v1326 = vpack.c.b16 %v1262, %v1254
    %v1327 = vpack.c.b16 %v1263, %v1255
    %v1328 = vpack.c.b16 %v1264, %v1256
    %v1329 = vpack.c.b16 %v1265, %v1257
    %v1330 = vpack.c.b16 %v1266, %v1258
    %v1331 = vpack.c.b16 %v1267, %v1259
    %v1332 = vpack.c.b16 %v1268, %v1260
    %1397 = vmatprep.subr.bf16.mxu0 %v1270
    %1398 = vmatpush1.bf16.msra.mxu0 %v1269
    %1399 = vmatprep.subr.bf16.mxu0 %v1278
    %1400 = vmatpush1.bf16.msra.mxu0 %v1277
    %1401 = vmatprep.subr.bf16.mxu0 %v1286
    %1402 = vmatpush1.bf16.msra.mxu0 %v1285
    %1403 = vmatprep.subr.bf16.mxu0 %v1294
    %1404 = vmatpush1.bf16.msra.mxu0 %v1293
    %1405 = vmatprep.subr.bf16.mxu0 %v1302
    %1406 = vmatpush1.bf16.msra.mxu0 %v1301
    %1407 = vmatprep.subr.bf16.mxu0 %v1310
    %1408 = vmatpush1.bf16.msra.mxu0 %v1309
    %1409 = vmatprep.subr.bf16.mxu0 %v1318
    %1410 = vmatpush1.bf16.msra.mxu0 %v1317
    %1411 = vmatprep.subr.bf16.mxu0 %v1326
    %1412 = vmatpush1.bf16.msra.mxu0 %v1325
    %1413 = vmatprep.subr.bf16.mxu0 0
    %1414 = vmatpush1.bf16.msra.mxu0 0
    %1415 = vmatprep.subr.bf16.mxu0 0
    %1416 = vmatpush1.bf16.msra.mxu0 0
    %1417 = vmatprep.subr.bf16.mxu0 0
    %1418 = vmatpush1.bf16.msra.mxu0 0
    %1419 = vmatprep.subr.bf16.mxu0 0
    %1420 = vmatpush1.bf16.msra.mxu0 0
    %1421 = vmatprep.subr.bf16.mxu0 0
    %1422 = vmatpush1.bf16.msra.mxu0 0
    %1423 = vmatprep.subr.bf16.mxu0 0
    %1424 = vmatpush1.bf16.msra.mxu0 0
    %1425 = vmatprep.subr.bf16.mxu0 0
    %1426 = vmatpush1.bf16.msra.mxu0 0
    %1427 = vmatprep.subr.bf16.mxu0 0
    %1428 = vmatpush1.bf16.msra.mxu0 0
    %1429 = vmatprep.mubr.bf16.mxu0 0
    %1430 = vmatmul.mubr.bf16.gmra.mrb[0].mxu0 %v969
    %v1431 = vpop.f32.mrb[0].mxu0
    %v1432 = vadd.f32 %v1040, %v1431
    %v1433 = vpop.f32.mrb[0].mxu0
    %v1434 = vadd.f32 %v1044, %v1433
    %v1435 = vpop.f32.mrb[0].mxu0
    %v1436 = vpop.f32.mrb[0].mxu0
    %1437 = vdwg.mxu0
    %1438 = vmatprep.subr.bf16.mxu0 %v1272
    %1439 = vmatpush1.bf16.msra.mxu0 %v1271
    %1440 = vmatprep.subr.bf16.mxu0 %v1280
    %1441 = vmatpush1.bf16.msra.mxu0 %v1279
    %1442 = vmatprep.subr.bf16.mxu0 %v1288
    %1443 = vmatpush1.bf16.msra.mxu0 %v1287
    %1444 = vmatprep.subr.bf16.mxu0 %v1296
    %1445 = vmatpush1.bf16.msra.mxu0 %v1295
    %1446 = vmatprep.subr.bf16.mxu0 %v1304
    %1447 = vmatpush1.bf16.msra.mxu0 %v1303
    %1448 = vmatprep.subr.bf16.mxu0 %v1312
    %1449 = vmatpush1.bf16.msra.mxu0 %v1311
    %1450 = vmatprep.subr.bf16.mxu0 %v1320
    %1451 = vmatpush1.bf16.msra.mxu0 %v1319
    %1452 = vmatprep.subr.bf16.mxu0 %v1328
    %1453 = vmatpush1.bf16.msra.mxu0 %v1327
    %1454 = vmatprep.subr.bf16.mxu0 0
    %1455 = vmatpush1.bf16.msra.mxu0 0
    %1456 = vmatprep.subr.bf16.mxu0 0
    %1457 = vmatpush1.bf16.msra.mxu0 0
    %1458 = vmatprep.subr.bf16.mxu0 0
    %1459 = vmatpush1.bf16.msra.mxu0 0
    %1460 = vmatprep.subr.bf16.mxu0 0
    %1461 = vmatpush1.bf16.msra.mxu0 0
    %1462 = vmatprep.subr.bf16.mxu0 0
    %1463 = vmatpush1.bf16.msra.mxu0 0
    %1464 = vmatprep.subr.bf16.mxu0 0
    %1465 = vmatpush1.bf16.msra.mxu0 0
    %1466 = vmatprep.subr.bf16.mxu0 0
    %1467 = vmatpush1.bf16.msra.mxu0 0
    %1468 = vmatprep.subr.bf16.mxu0 0
    %1469 = vmatpush1.bf16.msra.mxu0 0
    %1470 = vmatprep.mubr.bf16.mxu0 0
    %1471 = vmatmul.mubr.bf16.gmra.mrb[0].mxu0 %v969
    %v1472 = vpop.f32.mrb[0].mxu0
    %v1473 = vadd.f32 %v1048, %v1472
    %v1474 = vpop.f32.mrb[0].mxu0
    %v1475 = vadd.f32 %v1052, %v1474
    %v1476 = vpop.f32.mrb[0].mxu0
    %v1477 = vpop.f32.mrb[0].mxu0
    %1478 = vdwg.mxu0
    %1479 = vmatprep.subr.bf16.mxu0 %v1274
    %1480 = vmatpush1.bf16.msra.mxu0 %v1273
    %1481 = vmatprep.subr.bf16.mxu0 %v1282
    %1482 = vmatpush1.bf16.msra.mxu0 %v1281
    %1483 = vmatprep.subr.bf16.mxu0 %v1290
    %1484 = vmatpush1.bf16.msra.mxu0 %v1289
    %1485 = vmatprep.subr.bf16.mxu0 %v1298
    %1486 = vmatpush1.bf16.msra.mxu0 %v1297
    %1487 = vmatprep.subr.bf16.mxu0 %v1306
    %1488 = vmatpush1.bf16.msra.mxu0 %v1305
    %1489 = vmatprep.subr.bf16.mxu0 %v1314
    %1490 = vmatpush1.bf16.msra.mxu0 %v1313
    %1491 = vmatprep.subr.bf16.mxu0 %v1322
    %1492 = vmatpush1.bf16.msra.mxu0 %v1321
    %1493 = vmatprep.subr.bf16.mxu0 %v1330
    %1494 = vmatpush1.bf16.msra.mxu0 %v1329
    %1495 = vmatprep.subr.bf16.mxu0 0
    %1496 = vmatpush1.bf16.msra.mxu0 0
    %1497 = vmatprep.subr.bf16.mxu0 0
    %1498 = vmatpush1.bf16.msra.mxu0 0
    %1499 = vmatprep.subr.bf16.mxu0 0
    %1500 = vmatpush1.bf16.msra.mxu0 0
    %1501 = vmatprep.subr.bf16.mxu0 0
    %1502 = vmatpush1.bf16.msra.mxu0 0
    %1503 = vmatprep.subr.bf16.mxu0 0
    %1504 = vmatpush1.bf16.msra.mxu0 0
    %1505 = vmatprep.subr.bf16.mxu0 0
    %1506 = vmatpush1.bf16.msra.mxu0 0
    %1507 = vmatprep.subr.bf16.mxu0 0
    %1508 = vmatpush1.bf16.msra.mxu0 0
    %1509 = vmatprep.subr.bf16.mxu0 0
    %1510 = vmatpush1.bf16.msra.mxu0 0
    %1511 = vmatprep.mubr.bf16.mxu0 0
    %1512 = vmatmul.mubr.bf16.gmra.mrb[0].mxu0 %v969
    %v1513 = vpop.f32.mrb[0].mxu0
    %v1514 = vadd.f32 %v1056, %v1513
    %v1515 = vpop.f32.mrb[0].mxu0
    %v1516 = vadd.f32 %v1060, %v1515
    %v1517 = vpop.f32.mrb[0].mxu0
    %v1518 = vpop.f32.mrb[0].mxu0
    %1519 = vdwg.mxu0
    %1520 = vmatprep.subr.bf16.mxu0 %v1276
    %1521 = vmatpush1.bf16.msra.mxu0 %v1275
    %1522 = vmatprep.subr.bf16.mxu0 %v1284
    %1523 = vmatpush1.bf16.msra.mxu0 %v1283
    %1524 = vmatprep.subr.bf16.mxu0 %v1292
    %1525 = vmatpush1.bf16.msra.mxu0 %v1291
    %1526 = vmatprep.subr.bf16.mxu0 %v1300
    %1527 = vmatpush1.bf16.msra.mxu0 %v1299
    %1528 = vmatprep.subr.bf16.mxu0 %v1308
    %1529 = vmatpush1.bf16.msra.mxu0 %v1307
    %1530 = vmatprep.subr.bf16.mxu0 %v1316
    %1531 = vmatpush1.bf16.msra.mxu0 %v1315
    %1532 = vmatprep.subr.bf16.mxu0 %v1324
    %1533 = vmatpush1.bf16.msra.mxu0 %v1323
    %1534 = vmatprep.subr.bf16.mxu0 %v1332
    %1535 = vmatpush1.bf16.msra.mxu0 %v1331
    %1536 = vmatprep.subr.bf16.mxu0 0
    %1537 = vmatpush1.bf16.msra.mxu0 0
    %1538 = vmatprep.subr.bf16.mxu0 0
    %1539 = vmatpush1.bf16.msra.mxu0 0
    %1540 = vmatprep.subr.bf16.mxu0 0
    %1541 = vmatpush1.bf16.msra.mxu0 0
    %1542 = vmatprep.subr.bf16.mxu0 0
    %1543 = vmatpush1.bf16.msra.mxu0 0
    %1544 = vmatprep.subr.bf16.mxu0 0
    %1545 = vmatpush1.bf16.msra.mxu0 0
    %1546 = vmatprep.subr.bf16.mxu0 0
    %1547 = vmatpush1.bf16.msra.mxu0 0
    %1548 = vmatprep.subr.bf16.mxu0 0
    %1549 = vmatpush1.bf16.msra.mxu0 0
    %1550 = vmatprep.subr.bf16.mxu0 0
    %1551 = vmatpush1.bf16.msra.mxu0 0
    %1552 = vmatprep.mubr.bf16.mxu0 0
    %1553 = vmatmul.mubr.bf16.gmra.mrb[0].mxu0 %v969
    %v1554 = vpop.f32.mrb[0].mxu0
    %v1555 = vadd.f32 %v1064, %v1554
    %v1556 = vpop.f32.mrb[0].mxu0
    %v1557 = vadd.f32 %v1068, %v1556
    %v1558 = vpop.f32.mrb[0].mxu0
    %v1559 = vpop.f32.mrb[0].mxu0
    %1560 = vdwg.mxu0
    %1561 = vst [vmem:[%s6] sm:$0xff] %v1432
    %1562 = vst [vmem:[%s6 + $0x8] sm:$0xff] %v1434
    %1563 = vst [vmem:[%s6 + $0x10] sm:$0xff] %v1473
    %1564 = vst [vmem:[%s6 + $0x18] sm:$0xff] %v1475
    %1565 = vst [vmem:[%s6 + $0x20] sm:$0xff] %v1514
    %1566 = vst [vmem:[%s6 + $0x28] sm:$0xff] %v1516
    %1567 = vst [vmem:[%s6 + $0x30] sm:$0xff] %v1555
    %1568 = vst [vmem:[%s6 + $0x38] sm:$0xff] %v1557
    %1569 = vst [vmem:[%s7] sm:$0xff] %v853
    // Predicated region
    $region34: #{autoencoder_forward.1} parent=1 // pred_check
      _
    $region35: #{autoencoder_forward.1} parent=1 // pred_check_branch
      %1571 = sbr.rel (0) target = $region37
    $region36: #{autoencoder_forward.1} parent=1 // pred_region
      _
    $region37: #{autoencoder_forward.1} parent=1 // pred_fallthru
      _
    // Predicated region
    $region38: #{autoencoder_forward.1} parent=1 // pred_check
      _
    $region39: #{autoencoder_forward.1} parent=1 // pred_check_branch
      %1573 = sbr.rel (0) target = $region41
    $region40: #{autoencoder_forward.1} parent=1 // pred_region
      _
    $region41: #{autoencoder_forward.1} parent=1 // pred_fallthru
      _
    // Predicated region
    $region42: #{autoencoder_forward.1} parent=1 // pred_check
      _
    $region43: #{autoencoder_forward.1} parent=1 // pred_check_branch
      %1575 = sbr.rel (0) target = $region45
    $region44: #{autoencoder_forward.1} parent=1 // pred_region
      _
    $region45: #{autoencoder_forward.1} parent=1 // pred_fallthru
      _
    // Predicated region
    $region46: #{autoencoder_forward.1} parent=1 // pred_check
      _
    $region47: #{autoencoder_forward.1} parent=1 // pred_check_branch
      %1577 = sbr.rel (0) target = $region49
    $region48: #{autoencoder_forward.1} parent=1 // pred_region
      _
    $region49: #{autoencoder_forward.1} parent=1 // pred_fallthru
      _
    %1578 = vsyncpa [#allocation3], 1
    %1579 = vsyncpa [#allocation5], 1

</llo_original>
